<compile_context>
chip_gen: v6e
topology: v6e:2x2x1
jax: 0.10.0
libtpu: 0.0.40
codegen_flags: <defaults>
</compile_context>

<pallas_src>
import functools
import math

import jax
import jax.numpy as jnp
from jax.experimental import pallas as pl
from jax.experimental.pallas import tpu as pltpu


def _round_up(x, m):
    return (x + m - 1) // m * m


def _layernorm(x, gamma, beta, eps=1e-5):
    mean = jnp.mean(x, axis=-1, keepdims=True)
    var = jnp.mean((x - mean) ** 2, axis=-1, keepdims=True)
    return (x - mean) * jax.lax.rsqrt(var + eps) * gamma + beta


def _cross_attn_kernel(*refs, heads, d_pad, kv_concat_x, exp_in_bf16):
    if kv_concat_x:
        (xq_ref, xf_ref, c_ref, gx_ref, bx_ref, gc_ref, bc_ref,
         wq_ref, wkv_ref, out_ref, k_cache, v_cache) = refs
    else:
        (xq_ref, c_ref, gx_ref, bx_ref, gc_ref, bc_ref,
         wq_ref, wkv_ref, out_ref, k_cache, v_cache) = refs
        xf_ref = None

    f32, bf16 = jnp.float32, jnp.bfloat16
    inner_p = heads * d_pad

    gx, bx = gx_ref[...].astype(f32), bx_ref[...].astype(f32)
    gc, bc = gc_ref[...].astype(f32), bc_ref[...].astype(f32)

    # ---- K/V path: depends only on the batch index, so build it ONCE per
    # batch (qi == 0) and cache bf16, h-leading K/V in VMEM scratch.  This
    # removes (n_qt-1)/n_qt of the largest matmul + the two big einshapes.
    @pl.when(pl.program_id(1) == 0)
    def _build_kv_cache():
        cn = _layernorm(c_ref[0].astype(f32), gc, bc)               # (M, DIM)
        if kv_concat_x:
            xfn = _layernorm(xf_ref[0].astype(f32), gx, bx)         # (N, DIM)
            kv_in = jnp.concatenate([cn, xfn], axis=0)              # (Mk, DIM)
        else:
            kv_in = cn
        # MXU: bf16 operands, f32 accumulation.  Fused K/V projection; slices
        # below are lane-aligned (inner_p % 128 == 0).
        kv = jnp.dot(kv_in.astype(bf16), wkv_ref[...],
                     preferred_element_type=f32)                    # (Mk, 2*INNER_P)
        mk = kv.shape[0]
        k_cache[...] = pltpu.einshape(
            "nhd->hnd", kv[:, :inner_p].astype(bf16).reshape(mk, heads, d_pad))
        v_cache[...] = pltpu.einshape(
            "nhd->hnd", kv[:, inner_p:].astype(bf16).reshape(mk, heads, d_pad))

    # ---- Q path + attention for this query tile (softmax scale is already
    # folded into wq_ref at parameter-prep time) ----
    xn = _layernorm(xq_ref[0].astype(f32), gx, bx)                  # (TQ, DIM)
    q = jnp.dot(xn.astype(bf16), wq_ref[...],
                preferred_element_type=f32)                         # (TQ, INNER_P)
    tq = q.shape[0]
    q3 = pltpu.einshape("nhd->hnd", q.astype(bf16).reshape(tq, heads, d_pad))

    k3 = k_cache[...]                                               # (H, Mk, Dp) bf16
    v3 = v_cache[...]                                               # (H, Mk, Dp) bf16

    sim = jnp.einsum("hqd,hkd->hqk", q3, k3,
                     preferred_element_type=f32)                    # (H, TQ, Mk)
    sim_max = jnp.max(sim, axis=-1, keepdims=True)
    z = sim - sim_max
    if exp_in_bf16:
        # v6e / v7x: bf16 EUP path (~2x exp throughput, half the footprint);
        # p is consumed in bf16 by the PV matmul anyway.
        p_mm = jnp.exp(z.astype(bf16))                              # (H, TQ, Mk) bf16
        l = jnp.sum(p_mm.astype(f32), axis=-1, keepdims=True)       # (H, TQ, 1)
    else:
        # v5e: no bf16 VPU/EUP -> keep the exponent in f32.
        p = jnp.exp(z)
        l = jnp.sum(p, axis=-1, keepdims=True)
        p_mm = p.astype(bf16)
    inv_l = pl.reciprocal(l, approx=True)                           # EUP slot, ~free

    o = jnp.einsum("hqk,hkd->hqd", p_mm, v3,
                   preferred_element_type=f32)                      # (H, TQ, Dp)
    o = o * inv_l                                                   # 1/l on the small side

    out = pltpu.einshape("hnd->nhd", o).reshape(tq, inner_p)        # 'h n d -> n (h d)'
    out_ref[0] = out.astype(out_ref.dtype)


def _vmem_ceiling_bytes():
    """~85% of this generation's physical VMEM (v5e/v6e: 128 MiB, v7x: 64 MiB)."""
    try:
        cap = getattr(pltpu.get_tpu_info(), "vmem_capacity_bytes", None)
        if cap:
            return int(cap * 0.85)
    except Exception:
        pass
    return 56 << 20  # conservative fallback ~= 85% of v7x's 64 MiB


def _default_exp_in_bf16():
    """Use a bf16 exponent only where the EUP has a bf16 path (v6e / v7x)."""
    try:
        kind = jax.devices()[0].device_kind.lower()
    except Exception:
        return False
    return ("v6" in kind) or ("v7" in kind) or ("7x" in kind)


def _vmem_estimate(tq, n, m, mk, dim, heads, d_pad, inner_p,
                   in_isz, out_isz, kv_concat_x):
    """Generous per-step VMEM estimate (buffers + scratch + live temporaries)."""
    est = 2 * dim * inner_p + 2 * dim * 2 * inner_p        # bf16 weights (Buffered(1))
    est += 4 * dim * 4                                      # LN params, f32
    est += 2 * tq * dim * in_isz                            # x query tile (x2 buffers)
    est += 2 * m * dim * in_isz                             # context (resident per batch)
    if kv_concat_x:
        est += 2 * n * dim * in_isz                         # full x (resident per batch)
    est += 2 * tq * inner_p * out_isz                       # output tile (x2 buffers)
    est += 2 * heads * mk * d_pad * 2                       # k/v bf16 scratch cache
    # live temporaries: qi==0 K/V build + per-tile attention
    est += (2 * tq * dim + tq * inner_p) * 4 + tq * inner_p * 2
    est += (mk * dim + mk * 2 * inner_p) * 4 + mk * dim * 2
    est += 2 * heads * mk * d_pad * 2                       # einshape copies
    est += heads * tq * mk * (4 + 4 + 2)                    # sim, p (f32 worst), p bf16
    est += 2 * heads * tq * d_pad * 4 + tq * inner_p * 4    # o, o*inv_l, merged out
    est += 4 << 20                                          # Mosaic internal headroom
    return est


def cross_attention_dropout_proj(x, context, params, *, heads, dim_head,
                                 kv_concat_x=False, q_tile=256,
                                 exp_in_bf16=None):
    """Pallas implementation of CrossAttentionDropOutProj.forward."""
    b, n, dim = x.shape
    _, m, _ = context.shape
    inner = heads * dim_head
    scale = dim_head ** (-0.5)
    if exp_in_bf16 is None:
        exp_in_bf16 = _default_exp_in_bf16()

    # Pad dim_head so heads * d_pad is a multiple of 128 (lane-dense output
    # stores, lane-aligned k/v slices).  No-op when already aligned.
    d_pad = _round_up(dim_head, 128 // math.gcd(heads, 128))
    inner_p = heads * d_pad
    mk = m + n if kv_concat_x else m

    # ---- parameter glue: transpose, fold scale into Wq, per-head zero-pad,
    # cast to bf16 (one-time trace-level work, not hot-path) ----
    def pad_heads(w_t):                        # w_t: (dim, heads*dim_head)
        w3 = w_t.reshape(dim, heads, dim_head)
        w3 = jnp.pad(w3, ((0, 0), (0, 0), (0, d_pad - dim_head)))
        return w3.reshape(dim, inner_p)

    wq_t = params["wq"].T.astype(jnp.float32) * scale      # (DIM, INNER), scale folded
    wkv_t = params["wkv"].T.astype(jnp.float32)            # (DIM, 2*INNER)
    wq_p = pad_heads(wq_t).astype(jnp.bfloat16)             # (DIM, INNER_P)
    wkv_p = jnp.concatenate(
        [pad_heads(wkv_t[:, :inner]), pad_heads(wkv_t[:, inner:])],
        axis=1).astype(jnp.bfloat16)                         # (DIM, 2*INNER_P)

    gx = params["ln_media_w"].reshape(1, dim).astype(jnp.float32)
    bx = params["ln_media_b"].reshape(1, dim).astype(jnp.float32)
    gc = params["ln_ctx_w"].reshape(1, dim).astype(jnp.float32)
    bc = params["ln_ctx_b"].reshape(1, dim).astype(jnp.float32)

    # ---- grid / tiling: shrink the query tile until the per-step working
    # set fits this generation's VMEM ceiling ----
    in_isz = jnp.dtype(x.dtype).itemsize
    out_isz = in_isz
    ceiling = _vmem_ceiling_bytes()
    tq = n if n <= q_tile else q_tile
    while n > tq and tq > 128 and _vmem_estimate(
            tq, n, m, mk, dim, heads, d_pad, inner_p,
            in_isz, out_isz, kv_concat_x) > ceiling:
        tq = max(128, tq // 2)
    n_qt = pl.cdiv(n, tq)
    vmem_limit = int(min(max(_vmem_estimate(
        tq, n, m, mk, dim, heads, d_pad, inner_p,
        in_isz, out_isz, kv_concat_x), 16 << 20), ceiling))

    # ---- BlockSpecs ----
    def _const_spec(shape):
        idx = lambda bi, qi: (0, 0)
        try:    # constant index map -> no re-DMA, so a single buffer suffices
            return pl.BlockSpec(shape, idx, pipeline_mode=pl.Buffered(1))
        except (AttributeError, TypeError):   # older jax without pipeline_mode
            return pl.BlockSpec(shape, idx)

    in_specs = [pl.BlockSpec((1, tq, dim), lambda bi, qi: (bi, qi, 0))]  # x (q tile)
    inputs = [x]
    if kv_concat_x:
        # Full x for the K/V path; VMEM-resident per batch, read only at qi==0.
        in_specs.append(pl.BlockSpec((1, n, dim), lambda bi, qi: (bi, 0, 0)))
        inputs.append(x)
    in_specs += [
        pl.BlockSpec((1, m, dim), lambda bi, qi: (bi, 0, 0)),   # context (resident)
        _const_spec((1, dim)),                                  # ln_media gamma
        _const_spec((1, dim)),                                  # ln_media beta
        _const_spec((1, dim)),                                  # ln_ctx gamma
        _const_spec((1, dim)),                                  # ln_ctx beta
        _const_spec((dim, inner_p)),                            # Wq^T  (bf16, scale folded)
        _const_spec((dim, 2 * inner_p)),                        # Wkv^T (bf16)
    ]
    inputs += [context, gx, bx, gc, bc, wq_p, wkv_p]

    kernel = functools.partial(
        _cross_attn_kernel, heads=heads, d_pad=d_pad,
        kv_concat_x=kv_concat_x, exp_in_bf16=exp_in_bf16)

    out_p = pl.pallas_call(
        kernel,
        out_shape=jax.ShapeDtypeStruct((b, n, inner_p), x.dtype),
        grid_spec=pltpu.PrefetchScalarGridSpec(
            num_scalar_prefetch=0,
            grid=(b, n_qt),
            in_specs=in_specs,
            out_specs=pl.BlockSpec((1, tq, inner_p),
                                   lambda bi, qi: (bi, qi, 0)),
            scratch_shapes=[
                pltpu.VMEM((heads, mk, d_pad), jnp.bfloat16),   # K cache (h-leading)
                pltpu.VMEM((heads, mk, d_pad), jnp.bfloat16),   # V cache (h-leading)
            ],
        ),
        compiler_params=pltpu.CompilerParams(
            # batch: "parallel" (megacore); query tiles must stay "arbitrary"
            # because the K/V cache written at qi == 0 feeds later qi.
            dimension_semantics=("parallel", "arbitrary"),
            vmem_limit_bytes=vmem_limit),
    )(*inputs)

    if d_pad != dim_head:
        out_p = out_p.reshape(b, n, heads, d_pad)[..., :dim_head]
        out_p = out_p.reshape(b, n, inner)
    return out_p


def _reference(x, context, params, *, heads, dim_head, kv_concat_x=False):
    """Plain-JAX f32 reference mirroring the PyTorch forward (for validation)."""
    inner = heads * dim_head
    scale = dim_head ** (-0.5)
    xn = _layernorm(x, params["ln_media_w"], params["ln_media_b"])
    cn = _layernorm(context, params["ln_ctx_w"], params["ln_ctx_b"])
    kv_in = jnp.concatenate([cn, xn], axis=1) if kv_concat_x else cn
    q = xn @ params["wq"].T
    kv = kv_in @ params["wkv"].T
    k, v = kv[..., :inner], kv[..., inner:]

    def split_heads(t):
        bq, nq, _ = t.shape
        return t.reshape(bq, nq, heads, dim_head).transpose(0, 2, 1, 3)

    q, k, v = split_heads(q) * scale, split_heads(k), split_heads(v)
    sim = jnp.einsum("bhid,bhjd->bhij", q, k)
    sim = sim - jnp.max(sim, axis=-1, keepdims=True)
    attn = jax.nn.softmax(sim, axis=-1)
    out = jnp.einsum("bhij,bhjd->bhid", attn, v)
    bq, hq, nq, dq = out.shape
    return out.transpose(0, 2, 1, 3).reshape(bq, nq, hq * dq)


if __name__ == "__main__":
    # Small deterministic config.  q_tile=8 forces two query tiles per batch
    # so the qi==0 K/V cache + reuse path is exercised.
    B, N, M = 2, 16, 16
    DIM, DIM_HEAD, HEADS = 32, 16, 2
    INNER = DIM_HEAD * HEADS

    key = jax.random.PRNGKey(0)
    k_x, k_c, k_q, k_kv, k_g1, k_b1, k_g2, k_b2 = jax.random.split(key, 8)

    x = jax.random.normal(k_x, (B, N, DIM), dtype=jnp.float32)
    context = jax.random.normal(k_c, (B, M, DIM), dtype=jnp.float32)

    params = {
        # nn.Linear(dim, inner_dim, bias=False) weight: (inner, dim)
        "wq": jax.random.normal(k_q, (INNER, DIM), dtype=jnp.float32) / jnp.sqrt(DIM),
        # nn.Linear(dim, 2*inner_dim, bias=False) weight: (2*inner, dim)
        "wkv": jax.random.normal(k_kv, (2 * INNER, DIM), dtype=jnp.float32) / jnp.sqrt(DIM),
        # LayerNorm params (nontrivial for a stronger test; torch default is 1/0)
        "ln_media_w": 1.0 + 0.1 * jax.random.normal(k_g1, (DIM,), dtype=jnp.float32),
        "ln_media_b": 0.1 * jax.random.normal(k_b1, (DIM,), dtype=jnp.float32),
        "ln_ctx_w": 1.0 + 0.1 * jax.random.normal(k_g2, (DIM,), dtype=jnp.float32),
        "ln_ctx_b": 0.1 * jax.random.normal(k_b2, (DIM,), dtype=jnp.float32),
    }

    for concat in (False, True):
        out = cross_attention_dropout_proj(
            x, context, params, heads=HEADS, dim_head=DIM_HEAD,
            kv_concat_x=concat, q_tile=8)
        out = jax.block_until_ready(out)
        ref = _reference(x, context, params, heads=HEADS, dim_head=DIM_HEAD,
                         kv_concat_x=concat)
        assert out.shape == (B, N, INNER), out.shape
        # bf16 MXU operands (+ bf16 exp on v6e/v7x) + approx reciprocal ->
        # slightly looser tolerance.
        assert jnp.allclose(out, ref, rtol=5e-2, atol=5e-2), (
            concat, float(jnp.max(jnp.abs(out - ref))))

    print("KERNEL_OK")
</pallas_src>

<mosaic_0001>
module attributes {stable_mosaic.version = 11 : i64} {
  func.func @_cross_attn_kernel(%arg0: i32, %arg1: i32, %arg2: memref<1x8x32xf32, #tpu.memory_space<vmem>>, %arg3: memref<1x16x32xf32, #tpu.memory_space<vmem>>, %arg4: memref<1x32xf32, #tpu.memory_space<vmem>>, %arg5: memref<1x32xf32, #tpu.memory_space<vmem>>, %arg6: memref<1x32xf32, #tpu.memory_space<vmem>>, %arg7: memref<1x32xf32, #tpu.memory_space<vmem>>, %arg8: memref<32x128xbf16, #tpu.memory_space<vmem>>, %arg9: memref<32x256xbf16, #tpu.memory_space<vmem>>, %arg10: memref<1x8x128xf32, #tpu.memory_space<vmem>>, %arg11: memref<2x16x64xbf16, #tpu.memory_space<vmem>>, %arg12: memref<2x16x64xbf16, #tpu.memory_space<vmem>>) attributes {dimension_semantics = [#tpu.dimension_semantics<parallel>, #tpu.dimension_semantics<arbitrary>], iteration_bounds = array<i64: 2, 2>, scalar_prefetch = 0 : i64, scratch_operands = 2 : i64, tpu.core_type = #tpu.core_type<tc>, window_params = [{transform_indices = @transform_0, window_bounds = array<i64: 1, 8, 32>}, {transform_indices = @transform_1, window_bounds = array<i64: 1, 16, 32>}, {pipeline_mode = #tpu.pipeline_mode<synchronous>, transform_indices = @transform_2, window_bounds = array<i64: 1, 32>}, {pipeline_mode = #tpu.pipeline_mode<synchronous>, transform_indices = @transform_3, window_bounds = array<i64: 1, 32>}, {pipeline_mode = #tpu.pipeline_mode<synchronous>, transform_indices = @transform_4, window_bounds = array<i64: 1, 32>}, {pipeline_mode = #tpu.pipeline_mode<synchronous>, transform_indices = @transform_5, window_bounds = array<i64: 1, 32>}, {pipeline_mode = #tpu.pipeline_mode<synchronous>, transform_indices = @transform_6, window_bounds = array<i64: 32, 128>}, {pipeline_mode = #tpu.pipeline_mode<synchronous>, transform_indices = @transform_7, window_bounds = array<i64: 32, 256>}, {transform_indices = @transform_8, window_bounds = array<i64: 1, 8, 128>}]} {
    %c0 = arith.constant 0 : index
    %c0_0 = arith.constant 0 : index
    %0 = vector.load %arg4[%c0, %c0_0] : memref<1x32xf32, #tpu.memory_space<vmem>>, vector<1x32xf32>
    %c0_1 = arith.constant 0 : index
    %c0_2 = arith.constant 0 : index
    %1 = vector.load %arg5[%c0_1, %c0_2] : memref<1x32xf32, #tpu.memory_space<vmem>>, vector<1x32xf32>
    %c0_3 = arith.constant 0 : index
    %c0_4 = arith.constant 0 : index
    %2 = vector.load %arg6[%c0_3, %c0_4] : memref<1x32xf32, #tpu.memory_space<vmem>>, vector<1x32xf32>
    %c0_5 = arith.constant 0 : index
    %c0_6 = arith.constant 0 : index
    %3 = vector.load %arg7[%c0_5, %c0_6] : memref<1x32xf32, #tpu.memory_space<vmem>>, vector<1x32xf32>
    %c0_i32 = arith.constant 0 : i32
    %4 = arith.cmpi eq, %arg1, %c0_i32 : i32
    %5 = arith.extui %4 : i1 to i32
    %c0_i32_7 = arith.constant 0 : i32
    %6 = arith.cmpi ne, %5, %c0_i32_7 : i32
    scf.if %6 {
      %c0_31 = arith.constant 0 : index
      %c0_32 = arith.constant 0 : index
      %c0_33 = arith.constant 0 : index
      %57 = vector.load %arg3[%c0_31, %c0_32, %c0_33] : memref<1x16x32xf32, #tpu.memory_space<vmem>>, vector<1x16x32xf32>
      %58 = vector.shape_cast %57 : vector<1x16x32xf32> to vector<16x32xf32>
      %cst_34 = arith.constant dense<0.000000e+00> : vector<16xf32>
      %59 = vector.multi_reduction <add>, %58, %cst_34 [1] : vector<16x32xf32> to vector<16xf32>
      %60 = vector.shape_cast %59 : vector<16xf32> to vector<16x1xf32>
      %cst_35 = arith.constant 3.200000e+01 : f32
      %61 = vector.broadcast %cst_35 : f32 to vector<16x1xf32>
      %62 = arith.divf %60, %61 : vector<16x1xf32>
      %63 = vector.broadcast %62 : vector<16x1xf32> to vector<16x32xf32>
      %64 = arith.subf %58, %63 : vector<16x32xf32>
      %65 = arith.mulf %64, %64 : vector<16x32xf32>
      %cst_36 = arith.constant dense<0.000000e+00> : vector<16xf32>
      %66 = vector.multi_reduction <add>, %65, %cst_36 [1] : vector<16x32xf32> to vector<16xf32>
      %67 = vector.shape_cast %66 : vector<16xf32> to vector<16x1xf32>
      %cst_37 = arith.constant 3.200000e+01 : f32
      %68 = vector.broadcast %cst_37 : f32 to vector<16x1xf32>
      %69 = arith.divf %67, %68 : vector<16x1xf32>
      %70 = vector.broadcast %62 : vector<16x1xf32> to vector<16x32xf32>
      %71 = arith.subf %58, %70 : vector<16x32xf32>
      %cst_38 = arith.constant 9.99999974E-6 : f32
      %72 = vector.broadcast %cst_38 : f32 to vector<16x1xf32>
      %73 = arith.addf %69, %72 : vector<16x1xf32>
      %74 = math.rsqrt %73 : vector<16x1xf32>
      %75 = vector.broadcast %74 : vector<16x1xf32> to vector<16x32xf32>
      %76 = arith.mulf %71, %75 : vector<16x32xf32>
      %77 = vector.broadcast %2 : vector<1x32xf32> to vector<16x32xf32>
      %78 = arith.mulf %76, %77 : vector<16x32xf32>
      %79 = vector.broadcast %3 : vector<1x32xf32> to vector<16x32xf32>
      %80 = arith.addf %78, %79 : vector<16x32xf32>
      %81 = arith.truncf %80 : vector<16x32xf32> to vector<16x32xbf16>
      %c0_39 = arith.constant 0 : index
      %c0_40 = arith.constant 0 : index
      %82 = vector.load %arg9[%c0_39, %c0_40] : memref<32x256xbf16, #tpu.memory_space<vmem>>, vector<32x256xbf16>
      %cst_41 = arith.constant dense<0.000000e+00> : vector<16x256xf32>
      %83 = tpu.matmul %81, %82, %cst_41 {dimension_numbers = #tpu.dot_dimension_numbers<[1], [0], [0], [1], [0, 0, 1, 1], [], []>} : vector<16x32xbf16>, vector<32x256xbf16>, vector<16x256xf32> -> vector<16x256xf32>
      %84 = vector.extract_strided_slice %83 {offsets = [0, 0], sizes = [16, 128], strides = [1, 1]} : vector<16x256xf32> to vector<16x128xf32>
      %85 = arith.truncf %84 : vector<16x128xf32> to vector<16x128xbf16>
      %86 = vector.shape_cast %85 : vector<16x128xbf16> to vector<16x2x64xbf16>
      %87 = tpu.transpose %86, [1, 0, 2] : vector<16x2x64xbf16> -> vector<2x16x64xbf16>
      %c0_42 = arith.constant 0 : index
      %c0_43 = arith.constant 0 : index
      %c0_44 = arith.constant 0 : index
      %88 = vector.load %arg11[%c0_42, %c0_43, %c0_44] : memref<2x16x64xbf16, #tpu.memory_space<vmem>>, vector<2x16x64xbf16>
      tpu.vector_store %arg11[%c0_42, %c0_43, %c0_44], %87 {strides = array<i32>} : memref<2x16x64xbf16, #tpu.memory_space<vmem>>, vector<2x16x64xbf16>,
      %89 = vector.extract_strided_slice %83 {offsets = [0, 128], sizes = [16, 128], strides = [1, 1]} : vector<16x256xf32> to vector<16x128xf32>
      %90 = arith.truncf %89 : vector<16x128xf32> to vector<16x128xbf16>
      %91 = vector.shape_cast %90 : vector<16x128xbf16> to vector<16x2x64xbf16>
      %92 = tpu.transpose %91, [1, 0, 2] : vector<16x2x64xbf16> -> vector<2x16x64xbf16>
      %c0_45 = arith.constant 0 : index
      %c0_46 = arith.constant 0 : index
      %c0_47 = arith.constant 0 : index
      %93 = vector.load %arg12[%c0_45, %c0_46, %c0_47] : memref<2x16x64xbf16, #tpu.memory_space<vmem>>, vector<2x16x64xbf16>
      tpu.vector_store %arg12[%c0_45, %c0_46, %c0_47], %92 {strides = array<i32>} : memref<2x16x64xbf16, #tpu.memory_space<vmem>>, vector<2x16x64xbf16>,
    } else {
    }
    %c0_8 = arith.constant 0 : index
    %c0_9 = arith.constant 0 : index
    %c0_10 = arith.constant 0 : index
    %7 = vector.load %arg2[%c0_8, %c0_9, %c0_10] : memref<1x8x32xf32, #tpu.memory_space<vmem>>, vector<1x8x32xf32>
    %8 = vector.shape_cast %7 : vector<1x8x32xf32> to vector<8x32xf32>
    %cst = arith.constant dense<0.000000e+00> : vector<8xf32>
    %9 = vector.multi_reduction <add>, %8, %cst [1] : vector<8x32xf32> to vector<8xf32>
    %10 = vector.shape_cast %9 : vector<8xf32> to vector<8x1xf32>
    %cst_11 = arith.constant 3.200000e+01 : f32
    %11 = vector.broadcast %cst_11 : f32 to vector<8x1xf32>
    %12 = arith.divf %10, %11 : vector<8x1xf32>
    %13 = vector.broadcast %12 : vector<8x1xf32> to vector<8x32xf32>
    %14 = arith.subf %8, %13 : vector<8x32xf32>
    %15 = arith.mulf %14, %14 : vector<8x32xf32>
    %cst_12 = arith.constant dense<0.000000e+00> : vector<8xf32>
    %16 = vector.multi_reduction <add>, %15, %cst_12 [1] : vector<8x32xf32> to vector<8xf32>
    %17 = vector.shape_cast %16 : vector<8xf32> to vector<8x1xf32>
    %cst_13 = arith.constant 3.200000e+01 : f32
    %18 = vector.broadcast %cst_13 : f32 to vector<8x1xf32>
    %19 = arith.divf %17, %18 : vector<8x1xf32>
    %20 = vector.broadcast %12 : vector<8x1xf32> to vector<8x32xf32>
    %21 = arith.subf %8, %20 : vector<8x32xf32>
    %cst_14 = arith.constant 9.99999974E-6 : f32
    %22 = vector.broadcast %cst_14 : f32 to vector<8x1xf32>
    %23 = arith.addf %19, %22 : vector<8x1xf32>
    %24 = math.rsqrt %23 : vector<8x1xf32>
    %25 = vector.broadcast %24 : vector<8x1xf32> to vector<8x32xf32>
    %26 = arith.mulf %21, %25 : vector<8x32xf32>
    %27 = vector.broadcast %0 : vector<1x32xf32> to vector<8x32xf32>
    %28 = arith.mulf %26, %27 : vector<8x32xf32>
    %29 = vector.broadcast %1 : vector<1x32xf32> to vector<8x32xf32>
    %30 = arith.addf %28, %29 : vector<8x32xf32>
    %31 = arith.truncf %30 : vector<8x32xf32> to vector<8x32xbf16>
    %c0_15 = arith.constant 0 : index
    %c0_16 = arith.constant 0 : index
    %32 = vector.load %arg8[%c0_15, %c0_16] : memref<32x128xbf16, #tpu.memory_space<vmem>>, vector<32x128xbf16>
    %cst_17 = arith.constant dense<0.000000e+00> : vector<8x128xf32>
    %33 = tpu.matmul %31, %32, %cst_17 {dimension_numbers = #tpu.dot_dimension_numbers<[1], [0], [0], [1], [0, 0, 1, 1], [], []>} : vector<8x32xbf16>, vector<32x128xbf16>, vector<8x128xf32> -> vector<8x128xf32>
    %34 = arith.truncf %33 : vector<8x128xf32> to vector<8x128xbf16>
    %35 = vector.shape_cast %34 : vector<8x128xbf16> to vector<8x2x64xbf16>
    %36 = tpu.transpose %35, [1, 0, 2] : vector<8x2x64xbf16> -> vector<2x8x64xbf16>
    %c0_18 = arith.constant 0 : index
    %c0_19 = arith.constant 0 : index
    %c0_20 = arith.constant 0 : index
    %37 = vector.load %arg11[%c0_18, %c0_19, %c0_20] : memref<2x16x64xbf16, #tpu.memory_space<vmem>>, vector<2x16x64xbf16>
    %c0_21 = arith.constant 0 : index
    %c0_22 = arith.constant 0 : index
    %c0_23 = arith.constant 0 : index
    %38 = vector.load %arg12[%c0_21, %c0_22, %c0_23] : memref<2x16x64xbf16, #tpu.memory_space<vmem>>, vector<2x16x64xbf16>
    "tpu.trace_start"() <{level = 10 : i32, message = "hqd,hkd->hqk"}> : () -> ()
    %cst_24 = arith.constant dense<0.000000e+00> : vector<2x8x16xf32>
    %39 = tpu.matmul %36, %37, %cst_24 {dimension_numbers = #tpu.dot_dimension_numbers<[2], [2], [1], [1], [0, 0, 0, 1, 1, 1], [0], [0]>} : vector<2x8x64xbf16>, vector<2x16x64xbf16>, vector<2x8x16xf32> -> vector<2x8x16xf32>
    "tpu.trace_stop"() : () -> ()
    %cst_25 = arith.constant dense<0xFF800000> : vector<2x8xf32>
    %40 = vector.multi_reduction <maximumf>, %39, %cst_25 [2] : vector<2x8x16xf32> to vector<2x8xf32>
    %41 = vector.shape_cast %40 : vector<2x8xf32> to vector<2x8x1xf32>
    %42 = vector.broadcast %41 : vector<2x8x1xf32> to vector<2x8x16xf32>
    %43 = arith.subf %39, %42 : vector<2x8x16xf32>
    %44 = math.exp %43 : vector<2x8x16xf32>
    %cst_26 = arith.constant dense<0.000000e+00> : vector<2x8xf32>
    %45 = vector.multi_reduction <add>, %44, %cst_26 [2] : vector<2x8x16xf32> to vector<2x8xf32>
    %46 = vector.shape_cast %45 : vector<2x8xf32> to vector<2x8x1xf32>
    %47 = arith.truncf %44 : vector<2x8x16xf32> to vector<2x8x16xbf16>
    %48 = tpu.reciprocal %46 {approx = true} : vector<2x8x1xf32> -> vector<2x8x1xf32>
    "tpu.trace_start"() <{level = 10 : i32, message = "hqk,hkd->hqd"}> : () -> ()
    %cst_27 = arith.constant dense<0.000000e+00> : vector<2x8x64xf32>
    %49 = tpu.matmul %47, %38, %cst_27 {dimension_numbers = #tpu.dot_dimension_numbers<[2], [1], [1], [2], [0, 0, 0, 1, 1, 2], [0], [0]>} : vector<2x8x16xbf16>, vector<2x16x64xbf16>, vector<2x8x64xf32> -> vector<2x8x64xf32>
    "tpu.trace_stop"() : () -> ()
    %50 = vector.broadcast %48 : vector<2x8x1xf32> to vector<2x8x64xf32>
    %51 = arith.mulf %49, %50 : vector<2x8x64xf32>
    %52 = tpu.transpose %51, [1, 0, 2] : vector<2x8x64xf32> -> vector<8x2x64xf32>
    %53 = vector.shape_cast %52 : vector<8x2x64xf32> to vector<8x128xf32>
    %c0_28 = arith.constant 0 : index
    %c0_29 = arith.constant 0 : index
    %c0_30 = arith.constant 0 : index
    %54 = vector.load %arg10[%c0_28, %c0_29, %c0_30] : memref<1x8x128xf32, #tpu.memory_space<vmem>>, vector<1x8x128xf32>
    %55 = vector.shape_cast %54 : vector<1x8x128xf32> to vector<8x128xf32>
    %56 = vector.shape_cast %53 : vector<8x128xf32> to vector<1x8x128xf32>
    tpu.vector_store %arg10[%c0_28, %c0_29, %c0_30], %56 {strides = array<i32>} : memref<1x8x128xf32, #tpu.memory_space<vmem>>, vector<1x8x128xf32>,
    return
  }
  func.func @transform_0(%arg0: i32, %arg1: i32) -> (i32, i32, i32) {
    %c0_i32 = arith.constant 0 : i32
    %c0_i32_0 = arith.constant 0 : i32
    return %arg0, %arg1, %c0_i32 : i32, i32, i32
  }
  func.func @transform_1(%arg0: i32, %arg1: i32) -> (i32, i32, i32) {
    %c0_i32 = arith.constant 0 : i32
    %c0_i32_0 = arith.constant 0 : i32
    %c0_i32_1 = arith.constant 0 : i32
    return %arg0, %c0_i32, %c0_i32_0 : i32, i32, i32
  }
  func.func @transform_2(%arg0: i32, %arg1: i32) -> (i32, i32) {
    %c0_i32 = arith.constant 0 : i32
    %c0_i32_0 = arith.constant 0 : i32
    %c0_i32_1 = arith.constant 0 : i32
    return %c0_i32, %c0_i32_0 : i32, i32
  }
  func.func @transform_3(%arg0: i32, %arg1: i32) -> (i32, i32) {
    %c0_i32 = arith.constant 0 : i32
    %c0_i32_0 = arith.constant 0 : i32
    %c0_i32_1 = arith.constant 0 : i32
    return %c0_i32, %c0_i32_0 : i32, i32
  }
  func.func @transform_4(%arg0: i32, %arg1: i32) -> (i32, i32) {
    %c0_i32 = arith.constant 0 : i32
    %c0_i32_0 = arith.constant 0 : i32
    %c0_i32_1 = arith.constant 0 : i32
    return %c0_i32, %c0_i32_0 : i32, i32
  }
  func.func @transform_5(%arg0: i32, %arg1: i32) -> (i32, i32) {
    %c0_i32 = arith.constant 0 : i32
    %c0_i32_0 = arith.constant 0 : i32
    %c0_i32_1 = arith.constant 0 : i32
    return %c0_i32, %c0_i32_0 : i32, i32
  }
  func.func @transform_6(%arg0: i32, %arg1: i32) -> (i32, i32) {
    %c0_i32 = arith.constant 0 : i32
    %c0_i32_0 = arith.constant 0 : i32
    %c0_i32_1 = arith.constant 0 : i32
    return %c0_i32, %c0_i32_0 : i32, i32
  }
  func.func @transform_7(%arg0: i32, %arg1: i32) -> (i32, i32) {
    %c0_i32 = arith.constant 0 : i32
    %c0_i32_0 = arith.constant 0 : i32
    %c0_i32_1 = arith.constant 0 : i32
    return %c0_i32, %c0_i32_0 : i32, i32
  }
  func.func @transform_8(%arg0: i32, %arg1: i32) -> (i32, i32, i32) {
    %c0_i32 = arith.constant 0 : i32
    %c0_i32_0 = arith.constant 0 : i32
    return %arg0, %arg1, %c0_i32 : i32, i32, i32
  }
}

</mosaic_0001>

<llo_original>
// kernel: tpu_custom_call.1
$region0: #{tpu_custom_call.1}
  #allocation0 [shape = 'u32[]', space=smem, size = 0x4, offset = 0x4, fixed_abs, tag = 'smem constant byte address 0x4 - core index']
  #allocation1 [shape = 'u32[144,128]{1,0:T(1,128)}', space=vmem, size = 0x12000, scoped, tag = 'internal scratch']
  #allocation2 [shape = 'bf16[2,16,64]{2,1,0:T(8,128)(2,1)}', space=vmem, size = 0x2000, scoped, tag = 'scratch operand']
  #allocation3 [shape = 'bf16[2,16,64]{2,1,0:T(8,128)(2,1)}', space=vmem, size = 0x2000, scoped, tag = 'scratch operand']
  %s0 = inlined_call_operand.hbm [shape: f32[2,16,32], index: 0, kind: input, shape index: {}]
  %s1 = inlined_call_operand.hbm [shape: f32[2,16,32], index: 1, kind: input, shape index: {}]
  %s2 = inlined_call_operand.vmem [shape: f32[1,32], index: 2, kind: input, shape index: {}]
  %s3 = inlined_call_operand.vmem [shape: f32[1,32], index: 3, kind: input, shape index: {}]
  %s4 = inlined_call_operand.vmem [shape: f32[1,32], index: 4, kind: input, shape index: {}]
  %s5 = inlined_call_operand.vmem [shape: f32[1,32], index: 5, kind: input, shape index: {}]
  %s6 = inlined_call_operand.hbm [shape: bf16[32,128], index: 6, kind: input, shape index: {}]
  %s7 = inlined_call_operand.hbm [shape: bf16[32,256], index: 7, kind: input, shape index: {}]
  %s8 = inlined_call_operand.hbm [shape: f32[2,16,128], index: 8, kind: output, shape index: {}]
  %s9 = sld [smem:[#allocation0]]
  $region85: #{tpu_custom_call.1} parent=0
    _
  %s11 = ssub.s32 1, %s9
  %s12 = scalar_select 0, %s11, %s9
  $region1: #{tpu_custom_call.1} parent=0
    #allocation4 [shape = 'u8[8192]{0}', space=vmem, size = 0x2000, scoped, tag = 'input window, operand 0']
    #allocation5 [shape = 's32[2]{0}', space=sflag, size = 0x8, scoped, tag = 'scoped memory for tpu_custom_call.1']
    #allocation6 [shape = 's32[2]{0}', space=sflag, size = 0x8, scoped, tag = 'scoped memory for tpu_custom_call.1']
    #allocation7 [shape = 'u8[16384]{0}', space=vmem, size = 0x4000, scoped, tag = 'input window, operand 1']
    #allocation8 [shape = 's32[2]{0}', space=sflag, size = 0x8, scoped, tag = 'scoped memory for tpu_custom_call.1']
    #allocation9 [shape = 'u8[8192]{0}', space=vmem, size = 0x2000, scoped, tag = 'input window, operand 6, single buffered']
    #allocation10 [shape = 'u8[16384]{0}', space=vmem, size = 0x4000, scoped, tag = 'input window, operand 7, single buffered']
    #allocation11 [shape = 's32[1]{0}', space=sflag, size = 0x4, scoped, tag = 'scoped memory for tpu_custom_call.1']
    #allocation12 [shape = 'u8[8192]{0}', space=vmem, size = 0x2000, scoped, tag = 'output window, operand 0']
    %13 = vsyncpa [#allocation5], 0
    %s14 = scalar_lea.sflag [#allocation5], 1
    %15 = vsyncpa %s14, 0
    %16 = vsyncpa [#allocation8], 0
    %s17 = scalar_lea.sflag [#allocation8], 1
    %18 = vsyncpa %s17, 0
    %19 = vsyncpa [#allocation11], 0
    %20 = vsyncpa [#allocation6], 0
    %s21 = scalar_lea.sflag [#allocation6], 1
    %22 = vsyncpa %s21, 0
    loop: start=0, step=1, limit=6
    $region2: #{tpu_custom_call.1} parent=1 // loop_pre_header
      _
    $region3: #{tpu_custom_call.1} parent=1 // loop_header
      %s24 = sphi 0, %s28
      %p25 = scmp.ge.s32.totalorder %s24, 6
      %s31 = sphi 0, %s43
      %s32 = sphi 0, %s39
      %s33 = sphi 0, %s31
      %s34 = sphi 0, %s32
      %s35 = sphi 0, %s33
      %s36 = sphi 0, %s34
      %s48 = sphi 0, %s50
      %s51 = sphi 0, %s48
      %s52 = sphi 0, %s51
      %s68 = sphi 0, %s52
      %s74 = sphi 0, %s76
      %s77 = sphi 0, %s74
      %s78 = sphi 0, %s77
      %s94 = sphi 0, %s78
      %s98 = sphi 0, %s98
      %s100 = sphi 0, %s98
      %s101 = sphi 0, %s100
      %s115 = sphi 0, %s101
      %s119 = sphi 0, %s119
      %s121 = sphi 0, %s119
      %s122 = sphi 0, %s121
      %s136 = sphi 0, %s122
      %s140 = sphi 0, %s140
      %s142 = sphi 0, %s140
      %s143 = sphi 0, %s142
      %s157 = sphi 0, %s143
      %s161 = sphi 0, %s161
      %s163 = sphi 0, %s161
      %s164 = sphi 0, %s163
      %s178 = sphi 0, %s164
      %s182 = sphi 0, %s182
      %s184 = sphi 0, %s182
      %s185 = sphi 0, %s184
      %s199 = sphi 0, %s185
      %s203 = sphi 0, %s203
      %s205 = sphi 0, %s203
      %s206 = sphi 0, %s205
      %s220 = sphi 0, %s206
      %s228 = sphi 0, %s230
      %s231 = sphi 0, %s228
      %s232 = sphi 0, %s231
      %s248 = sphi 0, %s232
    $region4: #{tpu_custom_call.1} parent=1 // loop_header_branch
      %27 = sbr.rel (%p25) target = $region8
    $region5: #{tpu_custom_call.1} parent=1 // loop_body
      %s29 = ssub.s32 %s24, 1
      %s30 = ssub.s32 %s24, 2
      %s37 = sadd.s32 1, %s32
      %p38 = scmp.ge.s32.totalorder %s37, 2
      %s39 = scalar_select %p38, 0, %s37
      %s40 = sadd.s32 1, %s31
      %s41 = scalar_select %p38, %s40, %s31
      %p42 = scmp.ge.s32.totalorder %s41, 2
      %s43 = scalar_select %p42, 0, %s41
      %s44 = ssub.s32 %s31, %s43
      %s45 = ssub.s32 %s32, %s39
      %s46 = sor.u32 %s44, %s45
      %p47 = scmp.eq.s32.totalorder %s46, 0
      %s49 = sadd.s32 %s48, 1
      %s50 = scalar_select %p47, %s48, %s49
      %p53 = pneg %p47
      %p54 = scmp.eq.s32.totalorder %s24, 3
      %p55 = por %p53, %p54
      %p56 = scmp.ne.s32.totalorder %s48, %s51
      %p57 = scmp.eq.s32.totalorder %s24, 0
      %p58 = por %p56, %p57
      %p59 = scmp.ne.s32.totalorder %s48, %s51
      %p60 = scmp.eq.s32.totalorder %s29, 3
      %p61 = por %p59, %p60
      %p62 = scmp.ne.s32.totalorder %s51, %s52
      %p63 = scmp.eq.s32.totalorder %s29, 0
      %p64 = por %p62, %p63
      %p65 = scmp.ne.s32.totalorder %s51, %s52
      %p66 = scmp.eq.s32.totalorder %s30, 3
      %p67 = por %p65, %p66
      %p69 = scmp.ne.s32.totalorder %s52, %s68
      %p70 = scmp.eq.s32.totalorder %s30, 0
      %p71 = por %p69, %p70
      %s72 = ssub.s32 %s31, %s43
      %p73 = scmp.eq.s32.totalorder %s72, 0
      %s75 = sadd.s32 %s74, 1
      %s76 = scalar_select %p73, %s74, %s75
      %p79 = pneg %p73
      %p80 = scmp.eq.s32.totalorder %s24, 3
      %p81 = por %p79, %p80
      %p82 = scmp.ne.s32.totalorder %s74, %s77
      %p83 = scmp.eq.s32.totalorder %s24, 0
      %p84 = por %p82, %p83
      %p85 = scmp.ne.s32.totalorder %s74, %s77
      %p86 = scmp.eq.s32.totalorder %s29, 3
      %p87 = por %p85, %p86
      %p88 = scmp.ne.s32.totalorder %s77, %s78
      %p89 = scmp.eq.s32.totalorder %s29, 0
      %p90 = por %p88, %p89
      %p91 = scmp.ne.s32.totalorder %s77, %s78
      %p92 = scmp.eq.s32.totalorder %s30, 3
      %p93 = por %p91, %p92
      %p95 = scmp.ne.s32.totalorder %s78, %s94
      %p96 = scmp.eq.s32.totalorder %s30, 0
      %p97 = por %p95, %p96
      %s99 = sadd.s32 %s98, 1
      %p102 = scmp.eq.s32.totalorder %s24, 3
      %p103 = scmp.ne.s32.totalorder %s98, %s100
      %p104 = scmp.eq.s32.totalorder %s24, 0
      %p105 = por %p103, %p104
      %p106 = scmp.ne.s32.totalorder %s98, %s100
      %p107 = scmp.eq.s32.totalorder %s29, 3
      %p108 = por %p106, %p107
      %p109 = scmp.ne.s32.totalorder %s100, %s101
      %p110 = scmp.eq.s32.totalorder %s29, 0
      %p111 = por %p109, %p110
      %p112 = scmp.ne.s32.totalorder %s100, %s101
      %p113 = scmp.eq.s32.totalorder %s30, 3
      %p114 = por %p112, %p113
      %p116 = scmp.ne.s32.totalorder %s101, %s115
      %p117 = scmp.eq.s32.totalorder %s30, 0
      %p118 = por %p116, %p117
      %s120 = sadd.s32 %s119, 1
      %p123 = scmp.eq.s32.totalorder %s24, 3
      %p124 = scmp.ne.s32.totalorder %s119, %s121
      %p125 = scmp.eq.s32.totalorder %s24, 0
      %p126 = por %p124, %p125
      %p127 = scmp.ne.s32.totalorder %s119, %s121
      %p128 = scmp.eq.s32.totalorder %s29, 3
      %p129 = por %p127, %p128
      %p130 = scmp.ne.s32.totalorder %s121, %s122
      %p131 = scmp.eq.s32.totalorder %s29, 0
      %p132 = por %p130, %p131
      %p133 = scmp.ne.s32.totalorder %s121, %s122
      %p134 = scmp.eq.s32.totalorder %s30, 3
      %p135 = por %p133, %p134
      %p137 = scmp.ne.s32.totalorder %s122, %s136
      %p138 = scmp.eq.s32.totalorder %s30, 0
      %p139 = por %p137, %p138
      %s141 = sadd.s32 %s140, 1
      %p144 = scmp.eq.s32.totalorder %s24, 3
      %p145 = scmp.ne.s32.totalorder %s140, %s142
      %p146 = scmp.eq.s32.totalorder %s24, 0
      %p147 = por %p145, %p146
      %p148 = scmp.ne.s32.totalorder %s140, %s142
      %p149 = scmp.eq.s32.totalorder %s29, 3
      %p150 = por %p148, %p149
      %p151 = scmp.ne.s32.totalorder %s142, %s143
      %p152 = scmp.eq.s32.totalorder %s29, 0
      %p153 = por %p151, %p152
      %p154 = scmp.ne.s32.totalorder %s142, %s143
      %p155 = scmp.eq.s32.totalorder %s30, 3
      %p156 = por %p154, %p155
      %p158 = scmp.ne.s32.totalorder %s143, %s157
      %p159 = scmp.eq.s32.totalorder %s30, 0
      %p160 = por %p158, %p159
      %s162 = sadd.s32 %s161, 1
      %p165 = scmp.eq.s32.totalorder %s24, 3
      %p166 = scmp.ne.s32.totalorder %s161, %s163
      %p167 = scmp.eq.s32.totalorder %s24, 0
      %p168 = por %p166, %p167
      %p169 = scmp.ne.s32.totalorder %s161, %s163
      %p170 = scmp.eq.s32.totalorder %s29, 3
      %p171 = por %p169, %p170
      %p172 = scmp.ne.s32.totalorder %s163, %s164
      %p173 = scmp.eq.s32.totalorder %s29, 0
      %p174 = por %p172, %p173
      %p175 = scmp.ne.s32.totalorder %s163, %s164
      %p176 = scmp.eq.s32.totalorder %s30, 3
      %p177 = por %p175, %p176
      %p179 = scmp.ne.s32.totalorder %s164, %s178
      %p180 = scmp.eq.s32.totalorder %s30, 0
      %p181 = por %p179, %p180
      %s183 = sadd.s32 %s182, 1
      %p186 = scmp.eq.s32.totalorder %s24, 3
      %p187 = scmp.ne.s32.totalorder %s182, %s184
      %p188 = scmp.eq.s32.totalorder %s24, 0
      %p189 = por %p187, %p188
      %p190 = scmp.ne.s32.totalorder %s182, %s184
      %p191 = scmp.eq.s32.totalorder %s29, 3
      %p192 = por %p190, %p191
      %p193 = scmp.ne.s32.totalorder %s184, %s185
      %p194 = scmp.eq.s32.totalorder %s29, 0
      %p195 = por %p193, %p194
      %p196 = scmp.ne.s32.totalorder %s184, %s185
      %p197 = scmp.eq.s32.totalorder %s30, 3
      %p198 = por %p196, %p197
      %p200 = scmp.ne.s32.totalorder %s185, %s199
      %p201 = scmp.eq.s32.totalorder %s30, 0
      %p202 = por %p200, %p201
      %s204 = sadd.s32 %s203, 1
      %p207 = scmp.eq.s32.totalorder %s24, 3
      %p208 = scmp.ne.s32.totalorder %s203, %s205
      %p209 = scmp.eq.s32.totalorder %s24, 0
      %p210 = por %p208, %p209
      %p211 = scmp.ne.s32.totalorder %s203, %s205
      %p212 = scmp.eq.s32.totalorder %s29, 3
      %p213 = por %p211, %p212
      %p214 = scmp.ne.s32.totalorder %s205, %s206
      %p215 = scmp.eq.s32.totalorder %s29, 0
      %p216 = por %p214, %p215
      %p217 = scmp.ne.s32.totalorder %s205, %s206
      %p218 = scmp.eq.s32.totalorder %s30, 3
      %p219 = por %p217, %p218
      %p221 = scmp.ne.s32.totalorder %s206, %s220
      %p222 = scmp.eq.s32.totalorder %s30, 0
      %p223 = por %p221, %p222
      %s224 = ssub.s32 %s31, %s43
      %s225 = ssub.s32 %s32, %s39
      %s226 = sor.u32 %s224, %s225
      %p227 = scmp.eq.s32.totalorder %s226, 0
      %s229 = sadd.s32 %s228, 1
      %s230 = scalar_select %p227, %s228, %s229
      %p233 = pneg %p227
      %p234 = scmp.eq.s32.totalorder %s24, 3
      %p235 = por %p233, %p234
      %p236 = scmp.ne.s32.totalorder %s228, %s231
      %p237 = scmp.eq.s32.totalorder %s24, 0
      %p238 = por %p236, %p237
      %p239 = scmp.ne.s32.totalorder %s228, %s231
      %p240 = scmp.eq.s32.totalorder %s29, 3
      %p241 = por %p239, %p240
      %p242 = scmp.ne.s32.totalorder %s231, %s232
      %p243 = scmp.eq.s32.totalorder %s29, 0
      %p244 = por %p242, %p243
      %p245 = scmp.ne.s32.totalorder %s231, %s232
      %p246 = scmp.eq.s32.totalorder %s30, 3
      %p247 = por %p245, %p246
      %p249 = scmp.ne.s32.totalorder %s232, %s248
      %p250 = scmp.eq.s32.totalorder %s30, 0
      %p251 = por %p249, %p250
      %p252 = scmp.le.s32.totalorder 1, %s24
      %p253 = scmp.lt.s32.totalorder %s24, 5
      %p254 = pnand %p252, %p253
      %p255 = pneg %p254
      // Predicated region
      $region9: #{tpu_custom_call.1} parent=5 // pred_check
        _
      $region10: #{tpu_custom_call.1} parent=5 // pred_check_branch
        %257 = sbr.rel (%p254) target = $region12
      $region11: #{tpu_custom_call.1} parent=5 // pred_region
        %s258 = ssub.s32 %s24, 1
        // Predicated region
        $region13: #{tpu_custom_call.1} parent=11 // pred_check
          %p259 = pneg %p111
        $region14: #{tpu_custom_call.1} parent=11 // pred_check_branch
          %261 = sbr.rel (%p259) target = $region16
        $region15: #{tpu_custom_call.1} parent=11 // pred_region
          _
        $region16: #{tpu_custom_call.1} parent=11 // pred_fallthru
          _
        // Predicated region
        $region17: #{tpu_custom_call.1} parent=11 // pred_check
          %p262 = pneg %p132
        $region18: #{tpu_custom_call.1} parent=11 // pred_check_branch
          %264 = sbr.rel (%p262) target = $region20
        $region19: #{tpu_custom_call.1} parent=11 // pred_region
          _
        $region20: #{tpu_custom_call.1} parent=11 // pred_fallthru
          _
        // Predicated region
        $region21: #{tpu_custom_call.1} parent=11 // pred_check
          %p265 = pneg %p153
        $region22: #{tpu_custom_call.1} parent=11 // pred_check_branch
          %267 = sbr.rel (%p265) target = $region24
        $region23: #{tpu_custom_call.1} parent=11 // pred_region
          _
        $region24: #{tpu_custom_call.1} parent=11 // pred_fallthru
          _
        // Predicated region
        $region25: #{tpu_custom_call.1} parent=11 // pred_check
          %p268 = pneg %p174
        $region26: #{tpu_custom_call.1} parent=11 // pred_check_branch
          %270 = sbr.rel (%p268) target = $region28
        $region27: #{tpu_custom_call.1} parent=11 // pred_region
          _
        $region28: #{tpu_custom_call.1} parent=11 // pred_fallthru
          _
        // Predicated region
        $region29: #{tpu_custom_call.1} parent=11 // pred_check
          %p271 = pneg %p195
        $region30: #{tpu_custom_call.1} parent=11 // pred_check_branch
          %273 = sbr.rel (%p271) target = $region32
        $region31: #{tpu_custom_call.1} parent=11 // pred_region
          %s275 = ssub.s32 256, 256
          %276 = vsyncadd [#allocation8], %s275
          %s277 = sshll.u32 [#allocation9], 4
          %s278 = int_to_ptr.vmem [resolvable:$true] %s277
          %283 = dma.hbm_to_vmem [thread:$0]  %s6, 256, %s278, [#allocation8], 64, 64, 4
        $region32: #{tpu_custom_call.1} parent=11 // pred_fallthru
          _
        // Predicated region
        $region33: #{tpu_custom_call.1} parent=11 // pred_check
          %p284 = pneg %p216
        $region34: #{tpu_custom_call.1} parent=11 // pred_check_branch
          %286 = sbr.rel (%p284) target = $region36
        $region35: #{tpu_custom_call.1} parent=11 // pred_region
          %s288 = ssub.s32 512, 512
          %289 = vsyncadd [#allocation11], %s288
          %s290 = sshll.u32 [#allocation10], 4
          %s291 = int_to_ptr.vmem [resolvable:$true] %s290
          %296 = dma.hbm_to_vmem [thread:$0]  %s7, 512, %s291, [#allocation11], 128, 128, 8
        $region36: #{tpu_custom_call.1} parent=11 // pred_fallthru
          _
      $region12: #{tpu_custom_call.1} parent=5 // pred_fallthru
        _
      %p297 = scmp.lt.s32.totalorder %s24, 4
      // Predicated region
      $region37: #{tpu_custom_call.1} parent=5 // pred_check
        %p298 = pneg %p297
      $region38: #{tpu_custom_call.1} parent=5 // pred_check_branch
        %300 = sbr.rel (%p298) target = $region40
      $region39: #{tpu_custom_call.1} parent=5 // pred_region
        // Predicated region
        $region41: #{tpu_custom_call.1} parent=39 // pred_check
          %p301 = pneg %p58
        $region42: #{tpu_custom_call.1} parent=39 // pred_check_branch
          %303 = sbr.rel (%p301) target = $region44
        $region43: #{tpu_custom_call.1} parent=39 // pred_region
          %s304 = sand.u32 %s48, 1
          %s305 = scalar_lea.sflag [#allocation5], %s304
          %s306 = sand.u32 %s48, 1
          %s307 = smul.addr %s306, 8
          %s308 = scalar_lea.vmem [#allocation4], %s307
          %s310 = ssub.s32 128, 128
          %311 = vsyncadd %s305, %s310
          %s312 = smul.addr %s31, 2
          %s313 = sadd.s32 %s32, %s312
          %s314 = smul.addr %s313, 128
          %s315 = scalar_lea.hbm %s0, %s314
          %s317 = sshll.u32 %s308, 4
          %s318 = int_to_ptr.vmem [resolvable:$true] %s317
          %320 = dma.hbm_to_vmem [thread:$0]  %s315, 128, %s318, %s305
        $region44: #{tpu_custom_call.1} parent=39 // pred_fallthru
          _
        // Predicated region
        $region45: #{tpu_custom_call.1} parent=39 // pred_check
          %p321 = pneg %p84
        $region46: #{tpu_custom_call.1} parent=39 // pred_check_branch
          %323 = sbr.rel (%p321) target = $region48
        $region47: #{tpu_custom_call.1} parent=39 // pred_region
          %s324 = sand.u32 %s24, 1
          %s325 = scalar_lea.sflag [#allocation8], %s324
          %s326 = sand.u32 %s74, 1
          %s327 = smul.addr %s326, 16
          %s328 = scalar_lea.vmem [#allocation7], %s327
          %s330 = ssub.s32 256, 256
          %331 = vsyncadd %s325, %s330
          %s332 = smul.addr %s31, 2
          %s333 = smul.addr %s332, 128
          %s334 = scalar_lea.hbm %s1, %s333
          %s335 = sshll.u32 %s328, 4
          %s336 = int_to_ptr.vmem [resolvable:$true] %s335
          %341 = dma.hbm_to_vmem [thread:$0]  %s334, 256, %s336, %s325, 128, 128, 8
        $region48: #{tpu_custom_call.1} parent=39 // pred_fallthru
          _
      $region40: #{tpu_custom_call.1} parent=5 // pred_fallthru
        _
      %p342 = scmp.le.s32.totalorder 1, %s24
      %p343 = scmp.lt.s32.totalorder %s24, 5
      %p344 = pnand %p342, %p343
      %p345 = pneg %p344
      // Predicated region
      $region49: #{tpu_custom_call.1} parent=5 // pred_check
        _
      $region50: #{tpu_custom_call.1} parent=5 // pred_check_branch
        %347 = sbr.rel (%p344) target = $region52
      $region51: #{tpu_custom_call.1} parent=5 // pred_region
        %s348 = ssub.s32 %s24, 1
        %s349 = sand.u32 %s51, 1
        %s350 = scalar_lea.sflag [#allocation5], %s349
        %s351 = sand.u32 %s51, 1
        %s352 = smul.addr %s351, 8
        %s353 = scalar_lea.vmem [#allocation4], %s352
        // Predicated region
        $region53: #{tpu_custom_call.1} parent=51 // pred_check
          %p354 = pneg %p64
        $region54: #{tpu_custom_call.1} parent=51 // pred_check_branch
          %356 = sbr.rel (%p354) target = $region56
        $region55: #{tpu_custom_call.1} parent=51 // pred_region
          %357 = dma.done %s350, 128
        $region56: #{tpu_custom_call.1} parent=51 // pred_fallthru
          _
        %s358 = sand.u32 %s29, 1
        %s359 = scalar_lea.sflag [#allocation8], %s358
        %s360 = sand.u32 %s77, 1
        %s361 = smul.addr %s360, 16
        %s362 = scalar_lea.vmem [#allocation7], %s361
        // Predicated region
        $region57: #{tpu_custom_call.1} parent=51 // pred_check
          %p363 = pneg %p90
        $region58: #{tpu_custom_call.1} parent=51 // pred_check_branch
          %365 = sbr.rel (%p363) target = $region60
        $region59: #{tpu_custom_call.1} parent=51 // pred_region
          %366 = dma.done %s359, 256
        $region60: #{tpu_custom_call.1} parent=51 // pred_fallthru
          _
        // Predicated region
        $region61: #{tpu_custom_call.1} parent=51 // pred_check
          %p367 = pneg %p195
        $region62: #{tpu_custom_call.1} parent=51 // pred_check_branch
          %369 = sbr.rel (%p367) target = $region64
        $region63: #{tpu_custom_call.1} parent=51 // pred_region
          %370 = dma.done [#allocation8], 256
        $region64: #{tpu_custom_call.1} parent=51 // pred_fallthru
          _
        // Predicated region
        $region65: #{tpu_custom_call.1} parent=51 // pred_check
          %p371 = pneg %p216
        $region66: #{tpu_custom_call.1} parent=51 // pred_check_branch
          %373 = sbr.rel (%p371) target = $region68
        $region67: #{tpu_custom_call.1} parent=51 // pred_region
          %374 = dma.done [#allocation11], 512
        $region68: #{tpu_custom_call.1} parent=51 // pred_fallthru
          _
        %s375 = sand.u32 %s51, 1
        %s376 = scalar_lea.sflag [#allocation5], %s375
        %s377 = sand.u32 %s51, 1
        %s378 = smul.addr %s377, 8
        %s379 = scalar_lea.vmem [#allocation4], %s378
        %p380 = pneg %p64
        %p381 = pneg %p61
        %s382 = sand.u32 %s29, 1
        %s383 = scalar_lea.sflag [#allocation8], %s382
        %s384 = sand.u32 %s77, 1
        %s385 = smul.addr %s384, 16
        %s386 = scalar_lea.vmem [#allocation7], %s385
        %p387 = pneg %p90
        %p388 = pneg %p87
        %p389 = pneg %p111
        %p390 = pneg %p108
        %p391 = pneg %p132
        %p392 = pneg %p129
        %p393 = pneg %p153
        %p394 = pneg %p150
        %p395 = pneg %p174
        %p396 = pneg %p171
        %p397 = pneg %p195
        %p398 = pneg %p192
        %p399 = pneg %p216
        %p400 = pneg %p213
        %p401 = pneg %p244
        %p402 = pneg %p241
        %s403 = sand.u32 %s231, 1
        %s404 = scalar_lea.sflag [#allocation6], %s403
        %s405 = sand.u32 %s231, 1
        %s406 = smul.addr %s405, 8
        %s407 = scalar_lea.vmem [#allocation12], %s406
        %v409 = vld [vmem:[%s2] sm:$0x1]
        %v410 = vld [vmem:[%s3] sm:$0x1]
        %v411 = vld [vmem:[%s4] sm:$0x1]
        %v412 = vld [vmem:[%s5] sm:$0x1]
        %p413 = scmp.eq.s32.totalorder %s34, 0
        // Predicated region
        $region69: #{tpu_custom_call.1} parent=51 // pred_check
          %p414 = pneg %p413
        $region70: #{tpu_custom_call.1} parent=51 // pred_check_branch
          %416 = sbr.rel (%p414) target = $region72
        $region71: #{tpu_custom_call.1} parent=51 // pred_region
          %v417 = vld [vmem:[%s362] sm:$0xff]
          %v418 = vld [vmem:[%s362 + $0x8] sm:$0xff]
          %vm419 = vcmask 261120
          %v420 = vsel %vm419, %v417, 0.0
          %421 = vadd.xlane.f32.xlu0 %v420
          %v422 = vpop.xlane.xlu0 %421
          %v423 = vsel %vm419, %v418, 0.0
          %424 = vadd.xlane.f32.xlu0 %v423
          %v425 = vpop.xlane.xlu0 %424
          %v426 = vrcp.pop 32.0
          %v427 = vmul.f32 %v422, %v426
          %v428 = vmul.f32 %v425, %v426
          %v429 = vsub.f32 %v417, %v427
          %v430 = vsub.f32 %v418, %v428
          %v431 = vmul.f32 %v429, %v429
          %v432 = vmul.f32 %v430, %v430
          %v433 = vsel %vm419, %v431, 0.0
          %434 = vadd.xlane.f32.xlu0 %v433
          %v435 = vpop.xlane.xlu0 %434
          %v436 = vsel %vm419, %v432, 0.0
          %437 = vadd.xlane.f32.xlu0 %v436
          %v438 = vpop.xlane.xlu0 %437
          %v439 = vmul.f32 %v435, %v426
          %v440 = vmul.f32 %v438, %v426
          %v441 = vadd.f32 %v439, 1e-05
          %v442 = vadd.f32 %v440, 1e-05
          %v443 = vrsqrt.pop %v441
          %v444 = vrsqrt.pop %v442
          %v445 = vmul.f32 %v429, %v443
          %v446 = vmul.f32 %v430, %v444
          %v448 = vlaneseq
          %v449 = vshrl.u32 %v448, 7
          %v450 = vsub.s32 0, %v449
          %v451 = vrot.slane %v411, %v450
          %v453 = vmul.f32 %v445, %v451
          %v454 = vmul.f32 %v446, %v451
          %v456 = vlaneseq
          %v457 = vshrl.u32 %v456, 7
          %v458 = vsub.s32 0, %v457
          %v459 = vrot.slane %v412, %v458
          %v461 = vadd.f32 %v453, %v459
          %v462 = vadd.f32 %v454, %v459
          %v463 = vpack.c.bf16 %v462, %v461
          %v464 = vld [vmem:[#allocation10] sm:$0xff]
          %v465 = vld [vmem:[#allocation10 + $0x8] sm:$0xff]
          %v466 = vld [vmem:[#allocation10 + $0x10] sm:$0xff]
          %v467 = vld [vmem:[#allocation10 + $0x18] sm:$0xff]
          %v472 = vunpack.c.l.b16 %v464
          %v473 = vunpack.c.h.b16 %v464
          %v474 = vunpack.c.l.b16 %v465
          %v475 = vunpack.c.h.b16 %v465
          %v476 = vunpack.c.l.b16 %v466
          %v477 = vunpack.c.h.b16 %v466
          %v478 = vunpack.c.l.b16 %v467
          %v479 = vunpack.c.h.b16 %v467
          %v480 = vpack.c.b16 %v474, %v472
          %v481 = vpack.c.b16 %v475, %v473
          %v482 = vpack.c.b16 %v478, %v476
          %v483 = vpack.c.b16 %v479, %v477
          %v489 = vsel %vm419, %v463, 0
          %491 = vmatprep.subr.bf16.mxu0 0
          %492 = vmatpush1.bf16.msra.mxu0 0
          %493 = vmatprep.subr.bf16.mxu0 0
          %494 = vmatpush1.bf16.msra.mxu0 0
          %495 = vmatprep.subr.bf16.mxu0 0
          %496 = vmatpush1.bf16.msra.mxu0 0
          %497 = vmatprep.subr.bf16.mxu0 0
          %498 = vmatpush1.bf16.msra.mxu0 0
          %499 = vmatprep.subr.bf16.mxu0 0
          %500 = vmatpush1.bf16.msra.mxu0 0
          %501 = vmatprep.subr.bf16.mxu0 0
          %502 = vmatpush1.bf16.msra.mxu0 0
          %503 = vmatprep.subr.bf16.mxu0 %v483
          %504 = vmatpush1.bf16.msra.mxu0 %v482
          %505 = vmatprep.subr.bf16.mxu0 %v481
          %506 = vmatpush1.bf16.msra.mxu0 %v480
          %507 = vmatprep.subr.bf16.mxu0 0
          %508 = vmatpush2.bf16.msra.mxu0 0
          %509 = vmatprep.subr.bf16.mxu0 0
          %510 = vmatpush2.bf16.msra.mxu0 0
          %511 = vmatprep.subr.bf16.mxu0 0
          %512 = vmatpush2.bf16.msra.mxu0 0
          %513 = vmatprep.subr.bf16.mxu0 0
          %514 = vmatpush2.bf16.msra.mxu0 0
          %515 = vmatprep.subr.bf16.mxu0 0
          %516 = vmatpush2.bf16.msra.mxu0 0
          %517 = vmatprep.subr.bf16.mxu0 0
          %518 = vmatpush2.bf16.msra.mxu0 0
          %519 = vmatprep.subr.bf16.mxu0 0
          %520 = vmatpush2.bf16.msra.mxu0 0
          %521 = vmatprep.subr.bf16.mxu0 0
          %522 = vmatpush2.bf16.msra.mxu0 0
          %523 = vmatprep.mubr.bf16.mxu0 0
          %524 = vmatmul.mubr.bf16.gmra.mxu0 %v489
          %v525 = vpop.f32.mrf.mxu0
          %v526 = vadd.f32 0.0, %v525
          %v527 = vpop.f32.mrf.mxu0
          %v528 = vadd.f32 0.0, %v527
          %v529 = vpop.f32.mrf.mxu0
          %v530 = vadd.f32 0.0, %v529
          %v531 = vpop.f32.mrf.mxu0
          %v532 = vadd.f32 0.0, %v531
          %533 = vdwg.mxu0
          %v534 = vpack.c.bf16 %v530, %v526
          %536 = vrot.lane.b32.xlu0 %v534, 64
          %v537 = vpop.permute.xlu0 %536
          %v540 = vpack.i.b16 %v537, %v534
          %v542 = vshrl.u32 %v534, 16
          %v543 = vshrl.u32 %v537, 16
          %v544 = vpack.i.b16 %v543, %v542
          %v547 = vpack.i.b16 0, 0
          %v549 = vshrl.u32 0, 16
          %v550 = vpack.i.b16 %v549, %v549
          %v552 = vcombine.high %v540, %v547
          %v554 = vunpack.c.l.s4 1983009808
          %v555 = vunpack.c.0.s8 %v554
          %v556 = vlaneseq
          %v557 = vshrl.u32 %v556, 7
          %v558 = vsub.s32 %v555, %v557
          %v559 = vrot.slane %v540, %v558
          %v561 = vunpack.c.l.s4 1983009808
          %v562 = vunpack.c.0.s8 %v561
          %v563 = vlaneseq
          %v564 = vshrl.u32 %v563, 7
          %v565 = vsub.s32 %v562, %v564
          %v566 = vrot.slane %v552, %v565
          %v567 = vcombine.high %v559, 0
          %v569 = vunpack.c.l.s4 1934713408
          %v570 = vunpack.c.0.s8 %v569
          %v571 = vlaneseq
          %v572 = vshrl.u32 %v571, 7
          %v573 = vsub.s32 %v570, %v572
          %v574 = vrot.slane %v559, %v573
          %v576 = vunpack.c.l.s4 1934713408
          %v577 = vunpack.c.0.s8 %v576
          %v578 = vlaneseq
          %v579 = vshrl.u32 %v578, 7
          %v580 = vsub.s32 %v577, %v579
          %v581 = vrot.slane %v567, %v580
          %v582 = vcombine.high %v566, 0
          %v584 = vunpack.c.l.s4 1934713408
          %v585 = vunpack.c.0.s8 %v584
          %v586 = vlaneseq
          %v587 = vshrl.u32 %v586, 7
          %v588 = vsub.s32 %v585, %v587
          %v589 = vrot.slane %v566, %v588
          %v591 = vunpack.c.l.s4 1934713408
          %v592 = vunpack.c.0.s8 %v591
          %v593 = vlaneseq
          %v594 = vshrl.u32 %v593, 7
          %v595 = vsub.s32 %v592, %v594
          %v596 = vrot.slane %v582, %v595
          %v597 = vcombine.high %v574, 0
          %v598 = vcombine.high %v581, 0
          %v599 = vcombine.high %v589, 0
          %v600 = vcombine.high %v596, 0
          %v601 = vcombine.high %v544, %v550
          %v603 = vunpack.c.l.s4 1983009808
          %v604 = vunpack.c.0.s8 %v603
          %v605 = vlaneseq
          %v606 = vshrl.u32 %v605, 7
          %v607 = vsub.s32 %v604, %v606
          %v608 = vrot.slane %v544, %v607
          %v610 = vunpack.c.l.s4 1983009808
          %v611 = vunpack.c.0.s8 %v610
          %v612 = vlaneseq
          %v613 = vshrl.u32 %v612, 7
          %v614 = vsub.s32 %v611, %v613
          %v615 = vrot.slane %v601, %v614
          %v616 = vcombine.high %v608, 0
          %v618 = vunpack.c.l.s4 1934713408
          %v619 = vunpack.c.0.s8 %v618
          %v620 = vlaneseq
          %v621 = vshrl.u32 %v620, 7
          %v622 = vsub.s32 %v619, %v621
          %v623 = vrot.slane %v608, %v622
          %v625 = vunpack.c.l.s4 1934713408
          %v626 = vunpack.c.0.s8 %v625
          %v627 = vlaneseq
          %v628 = vshrl.u32 %v627, 7
          %v629 = vsub.s32 %v626, %v628
          %v630 = vrot.slane %v616, %v629
          %v631 = vcombine.high %v615, 0
          %v633 = vunpack.c.l.s4 1934713408
          %v634 = vunpack.c.0.s8 %v633
          %v635 = vlaneseq
          %v636 = vshrl.u32 %v635, 7
          %v637 = vsub.s32 %v634, %v636
          %v638 = vrot.slane %v615, %v637
          %v640 = vunpack.c.l.s4 1934713408
          %v641 = vunpack.c.0.s8 %v640
          %v642 = vlaneseq
          %v643 = vshrl.u32 %v642, 7
          %v644 = vsub.s32 %v641, %v643
          %v645 = vrot.slane %v631, %v644
          %v646 = vcombine.high %v623, 0
          %v647 = vcombine.high %v630, 0
          %v648 = vcombine.high %v638, 0
          %v649 = vcombine.high %v645, 0
          %v650 = vcombine.low %v574, %v581
          %v652 = vunpack.c.l.s4 1983009808
          %v653 = vunpack.c.0.s8 %v652
          %v654 = vlaneseq
          %v655 = vshrl.u32 %v654, 7
          %v656 = vsub.s32 %v653, %v655
          %v657 = vrot.slane %v650, %v656
          %v658 = vcombine.low %v597, %v598
          %v660 = vunpack.c.l.s4 1983009808
          %v661 = vunpack.c.0.s8 %v660
          %v662 = vlaneseq
          %v663 = vshrl.u32 %v662, 7
          %v664 = vsub.s32 %v661, %v663
          %v665 = vrot.slane %v658, %v664
          %v666 = vcombine.low %v589, %v596
          %v668 = vunpack.c.l.s4 1983009808
          %v669 = vunpack.c.0.s8 %v668
          %v670 = vlaneseq
          %v671 = vshrl.u32 %v670, 7
          %v672 = vsub.s32 %v669, %v671
          %v673 = vrot.slane %v666, %v672
          %v674 = vcombine.low %v599, %v600
          %v676 = vunpack.c.l.s4 1983009808
          %v677 = vunpack.c.0.s8 %v676
          %v678 = vlaneseq
          %v679 = vshrl.u32 %v678, 7
          %v680 = vsub.s32 %v677, %v679
          %v681 = vrot.slane %v674, %v680
          %v682 = vcombine.low %v657, %v665
          %v684 = vunpack.c.l.s4 1934713408
          %v685 = vunpack.c.0.s8 %v684
          %v686 = vlaneseq
          %v687 = vshrl.u32 %v686, 7
          %v688 = vsub.s32 %v685, %v687
          %v689 = vrot.slane %v682, %v688
          %v690 = vcombine.low %v673, %v681
          %v692 = vunpack.c.l.s4 1934713408
          %v693 = vunpack.c.0.s8 %v692
          %v694 = vlaneseq
          %v695 = vshrl.u32 %v694, 7
          %v696 = vsub.s32 %v693, %v695
          %v697 = vrot.slane %v690, %v696
          %v698 = vcombine.low %v689, %v697
          %v699 = vcombine.low %v623, %v630
          %v701 = vunpack.c.l.s4 1983009808
          %v702 = vunpack.c.0.s8 %v701
          %v703 = vlaneseq
          %v704 = vshrl.u32 %v703, 7
          %v705 = vsub.s32 %v702, %v704
          %v706 = vrot.slane %v699, %v705
          %v707 = vcombine.low %v646, %v647
          %v709 = vunpack.c.l.s4 1983009808
          %v710 = vunpack.c.0.s8 %v709
          %v711 = vlaneseq
          %v712 = vshrl.u32 %v711, 7
          %v713 = vsub.s32 %v710, %v712
          %v714 = vrot.slane %v707, %v713
          %v715 = vcombine.low %v638, %v645
          %v717 = vunpack.c.l.s4 1983009808
          %v718 = vunpack.c.0.s8 %v717
          %v719 = vlaneseq
          %v720 = vshrl.u32 %v719, 7
          %v721 = vsub.s32 %v718, %v720
          %v722 = vrot.slane %v715, %v721
          %v723 = vcombine.low %v648, %v649
          %v725 = vunpack.c.l.s4 1983009808
          %v726 = vunpack.c.0.s8 %v725
          %v727 = vlaneseq
          %v728 = vshrl.u32 %v727, 7
          %v729 = vsub.s32 %v726, %v728
          %v730 = vrot.slane %v723, %v729
          %v731 = vcombine.low %v706, %v714
          %v733 = vunpack.c.l.s4 1934713408
          %v734 = vunpack.c.0.s8 %v733
          %v735 = vlaneseq
          %v736 = vshrl.u32 %v735, 7
          %v737 = vsub.s32 %v734, %v736
          %v738 = vrot.slane %v731, %v737
          %v739 = vcombine.low %v722, %v730
          %v741 = vunpack.c.l.s4 1934713408
          %v742 = vunpack.c.0.s8 %v741
          %v743 = vlaneseq
          %v744 = vshrl.u32 %v743, 7
          %v745 = vsub.s32 %v742, %v744
          %v746 = vrot.slane %v739, %v745
          %v747 = vcombine.low %v738, %v746
          %v750 = vpack.i.b16 %v747, %v698
          %v751 = vshrl.u32 %v698, 16
          %v752 = vshrl.u32 %v747, 16
          %v753 = vpack.i.b16 %v752, %v751
          %v754 = vunpack.c.l.b16 %v750
          %v755 = vunpack.c.h.b16 %v750
          %v756 = vunpack.c.l.b16 %v753
          %v757 = vunpack.c.h.b16 %v753
          %v758 = vpack.c.b16 %v754, %v754
          %v759 = vpack.c.b16 %v755, %v755
          %v760 = vpack.c.b16 %v756, %v756
          %v761 = vpack.c.b16 %v757, %v757
          %vm766 = vcmask 519168
          %767 = vst.msk [vmem:[#allocation2] sm:$0xf] %vm766, %v758
          %768 = vst.msk [vmem:[#allocation2 + $0x4] sm:$0xf] %vm766, %v759
          %769 = vst.msk [vmem:[#allocation2 + $0x8] sm:$0xf] %vm766, %v760
          %770 = vst.msk [vmem:[#allocation2 + $0xc] sm:$0xf] %vm766, %v761
          %v771 = vpack.c.bf16 %v532, %v528
          %773 = vrot.lane.b32.xlu0 %v771, 64
          %v774 = vpop.permute.xlu0 %773
          %v777 = vpack.i.b16 %v774, %v771
          %v779 = vshrl.u32 %v771, 16
          %v780 = vshrl.u32 %v774, 16
          %v781 = vpack.i.b16 %v780, %v779
          %v783 = vcombine.high %v777, %v547
          %v785 = vunpack.c.l.s4 1983009808
          %v786 = vunpack.c.0.s8 %v785
          %v787 = vlaneseq
          %v788 = vshrl.u32 %v787, 7
          %v789 = vsub.s32 %v786, %v788
          %v790 = vrot.slane %v777, %v789
          %v792 = vunpack.c.l.s4 1983009808
          %v793 = vunpack.c.0.s8 %v792
          %v794 = vlaneseq
          %v795 = vshrl.u32 %v794, 7
          %v796 = vsub.s32 %v793, %v795
          %v797 = vrot.slane %v783, %v796
          %v798 = vcombine.high %v790, 0
          %v800 = vunpack.c.l.s4 1934713408
          %v801 = vunpack.c.0.s8 %v800
          %v802 = vlaneseq
          %v803 = vshrl.u32 %v802, 7
          %v804 = vsub.s32 %v801, %v803
          %v805 = vrot.slane %v790, %v804
          %v807 = vunpack.c.l.s4 1934713408
          %v808 = vunpack.c.0.s8 %v807
          %v809 = vlaneseq
          %v810 = vshrl.u32 %v809, 7
          %v811 = vsub.s32 %v808, %v810
          %v812 = vrot.slane %v798, %v811
          %v813 = vcombine.high %v797, 0
          %v815 = vunpack.c.l.s4 1934713408
          %v816 = vunpack.c.0.s8 %v815
          %v817 = vlaneseq
          %v818 = vshrl.u32 %v817, 7
          %v819 = vsub.s32 %v816, %v818
          %v820 = vrot.slane %v797, %v819
          %v822 = vunpack.c.l.s4 1934713408
          %v823 = vunpack.c.0.s8 %v822
          %v824 = vlaneseq
          %v825 = vshrl.u32 %v824, 7
          %v826 = vsub.s32 %v823, %v825
          %v827 = vrot.slane %v813, %v826
          %v828 = vcombine.high %v805, 0
          %v829 = vcombine.high %v812, 0
          %v830 = vcombine.high %v820, 0
          %v831 = vcombine.high %v827, 0
          %v832 = vcombine.high %v781, %v550
          %v834 = vunpack.c.l.s4 1983009808
          %v835 = vunpack.c.0.s8 %v834
          %v836 = vlaneseq
          %v837 = vshrl.u32 %v836, 7
          %v838 = vsub.s32 %v835, %v837
          %v839 = vrot.slane %v781, %v838
          %v841 = vunpack.c.l.s4 1983009808
          %v842 = vunpack.c.0.s8 %v841
          %v843 = vlaneseq
          %v844 = vshrl.u32 %v843, 7
          %v845 = vsub.s32 %v842, %v844
          %v846 = vrot.slane %v832, %v845
          %v847 = vcombine.high %v839, 0
          %v849 = vunpack.c.l.s4 1934713408
          %v850 = vunpack.c.0.s8 %v849
          %v851 = vlaneseq
          %v852 = vshrl.u32 %v851, 7
          %v853 = vsub.s32 %v850, %v852
          %v854 = vrot.slane %v839, %v853
          %v856 = vunpack.c.l.s4 1934713408
          %v857 = vunpack.c.0.s8 %v856
          %v858 = vlaneseq
          %v859 = vshrl.u32 %v858, 7
          %v860 = vsub.s32 %v857, %v859
          %v861 = vrot.slane %v847, %v860
          %v862 = vcombine.high %v846, 0
          %v864 = vunpack.c.l.s4 1934713408
          %v865 = vunpack.c.0.s8 %v864
          %v866 = vlaneseq
          %v867 = vshrl.u32 %v866, 7
          %v868 = vsub.s32 %v865, %v867
          %v869 = vrot.slane %v846, %v868
          %v871 = vunpack.c.l.s4 1934713408
          %v872 = vunpack.c.0.s8 %v871
          %v873 = vlaneseq
          %v874 = vshrl.u32 %v873, 7
          %v875 = vsub.s32 %v872, %v874
          %v876 = vrot.slane %v862, %v875
          %v877 = vcombine.high %v854, 0
          %v878 = vcombine.high %v861, 0
          %v879 = vcombine.high %v869, 0
          %v880 = vcombine.high %v876, 0
          %v881 = vcombine.low %v805, %v812
          %v883 = vunpack.c.l.s4 1983009808
          %v884 = vunpack.c.0.s8 %v883
          %v885 = vlaneseq
          %v886 = vshrl.u32 %v885, 7
          %v887 = vsub.s32 %v884, %v886
          %v888 = vrot.slane %v881, %v887
          %v889 = vcombine.low %v828, %v829
          %v891 = vunpack.c.l.s4 1983009808
          %v892 = vunpack.c.0.s8 %v891
          %v893 = vlaneseq
          %v894 = vshrl.u32 %v893, 7
          %v895 = vsub.s32 %v892, %v894
          %v896 = vrot.slane %v889, %v895
          %v897 = vcombine.low %v820, %v827
          %v899 = vunpack.c.l.s4 1983009808
          %v900 = vunpack.c.0.s8 %v899
          %v901 = vlaneseq
          %v902 = vshrl.u32 %v901, 7
          %v903 = vsub.s32 %v900, %v902
          %v904 = vrot.slane %v897, %v903
          %v905 = vcombine.low %v830, %v831
          %v907 = vunpack.c.l.s4 1983009808
          %v908 = vunpack.c.0.s8 %v907
          %v909 = vlaneseq
          %v910 = vshrl.u32 %v909, 7
          %v911 = vsub.s32 %v908, %v910
          %v912 = vrot.slane %v905, %v911
          %v913 = vcombine.low %v888, %v896
          %v915 = vunpack.c.l.s4 1934713408
          %v916 = vunpack.c.0.s8 %v915
          %v917 = vlaneseq
          %v918 = vshrl.u32 %v917, 7
          %v919 = vsub.s32 %v916, %v918
          %v920 = vrot.slane %v913, %v919
          %v921 = vcombine.low %v904, %v912
          %v923 = vunpack.c.l.s4 1934713408
          %v924 = vunpack.c.0.s8 %v923
          %v925 = vlaneseq
          %v926 = vshrl.u32 %v925, 7
          %v927 = vsub.s32 %v924, %v926
          %v928 = vrot.slane %v921, %v927
          %v929 = vcombine.low %v920, %v928
          %v930 = vcombine.low %v854, %v861
          %v932 = vunpack.c.l.s4 1983009808
          %v933 = vunpack.c.0.s8 %v932
          %v934 = vlaneseq
          %v935 = vshrl.u32 %v934, 7
          %v936 = vsub.s32 %v933, %v935
          %v937 = vrot.slane %v930, %v936
          %v938 = vcombine.low %v877, %v878
          %v940 = vunpack.c.l.s4 1983009808
          %v941 = vunpack.c.0.s8 %v940
          %v942 = vlaneseq
          %v943 = vshrl.u32 %v942, 7
          %v944 = vsub.s32 %v941, %v943
          %v945 = vrot.slane %v938, %v944
          %v946 = vcombine.low %v869, %v876
          %v948 = vunpack.c.l.s4 1983009808
          %v949 = vunpack.c.0.s8 %v948
          %v950 = vlaneseq
          %v951 = vshrl.u32 %v950, 7
          %v952 = vsub.s32 %v949, %v951
          %v953 = vrot.slane %v946, %v952
          %v954 = vcombine.low %v879, %v880
          %v956 = vunpack.c.l.s4 1983009808
          %v957 = vunpack.c.0.s8 %v956
          %v958 = vlaneseq
          %v959 = vshrl.u32 %v958, 7
          %v960 = vsub.s32 %v957, %v959
          %v961 = vrot.slane %v954, %v960
          %v962 = vcombine.low %v937, %v945
          %v964 = vunpack.c.l.s4 1934713408
          %v965 = vunpack.c.0.s8 %v964
          %v966 = vlaneseq
          %v967 = vshrl.u32 %v966, 7
          %v968 = vsub.s32 %v965, %v967
          %v969 = vrot.slane %v962, %v968
          %v970 = vcombine.low %v953, %v961
          %v972 = vunpack.c.l.s4 1934713408
          %v973 = vunpack.c.0.s8 %v972
          %v974 = vlaneseq
          %v975 = vshrl.u32 %v974, 7
          %v976 = vsub.s32 %v973, %v975
          %v977 = vrot.slane %v970, %v976
          %v978 = vcombine.low %v969, %v977
          %v981 = vpack.i.b16 %v978, %v929
          %v982 = vshrl.u32 %v929, 16
          %v983 = vshrl.u32 %v978, 16
          %v984 = vpack.i.b16 %v983, %v982
          %v985 = vunpack.c.l.b16 %v981
          %v986 = vunpack.c.h.b16 %v981
          %v987 = vunpack.c.l.b16 %v984
          %v988 = vunpack.c.h.b16 %v984
          %v989 = vpack.c.b16 %v985, %v985
          %v990 = vpack.c.b16 %v986, %v986
          %v991 = vpack.c.b16 %v987, %v987
          %v992 = vpack.c.b16 %v988, %v988
          %997 = vst.msk [vmem:[#allocation3] sm:$0xf] %vm766, %v989
          %998 = vst.msk [vmem:[#allocation3 + $0x4] sm:$0xf] %vm766, %v990
          %999 = vst.msk [vmem:[#allocation3 + $0x8] sm:$0xf] %vm766, %v991
          %1000 = vst.msk [vmem:[#allocation3 + $0xc] sm:$0xf] %vm766, %v992
        $region72: #{tpu_custom_call.1} parent=51 // pred_fallthru
          _
        %v1001 = vld [vmem:[%s353] sm:$0xff]
        %vm1002 = vcmask 261120
        %v1003 = vsel %vm1002, %v1001, 0.0
        %1004 = vadd.xlane.f32.xlu0 %v1003
        %v1005 = vpop.xlane.xlu0 %1004
        %v1006 = vrcp.pop 32.0
        %v1007 = vmul.f32 %v1005, %v1006
        %v1008 = vsub.f32 %v1001, %v1007
        %v1009 = vmul.f32 %v1008, %v1008
        %v1010 = vsel %vm1002, %v1009, 0.0
        %1011 = vadd.xlane.f32.xlu0 %v1010
        %v1012 = vpop.xlane.xlu0 %1011
        %v1013 = vmul.f32 %v1012, %v1006
        %v1014 = vadd.f32 %v1013, 1e-05
        %v1015 = vrsqrt.pop %v1014
        %v1016 = vmul.f32 %v1008, %v1015
        %v1018 = vlaneseq
        %v1019 = vshrl.u32 %v1018, 7
        %v1020 = vsub.s32 0, %v1019
        %v1021 = vrot.slane %v409, %v1020
        %v1023 = vmul.f32 %v1016, %v1021
        %v1025 = vlaneseq
        %v1026 = vshrl.u32 %v1025, 7
        %v1027 = vsub.s32 0, %v1026
        %v1028 = vrot.slane %v410, %v1027
        %v1030 = vadd.f32 %v1023, %v1028
        %v1031 = vpack.c.bf16 %v1030, %v1030
        %v1032 = vld [vmem:[#allocation9] sm:$0xf]
        %v1033 = vld [vmem:[#allocation9 + $0x4] sm:$0xf]
        %v1034 = vld [vmem:[#allocation9 + $0x8] sm:$0xf]
        %v1035 = vld [vmem:[#allocation9 + $0xc] sm:$0xf]
        %v1040 = vunpack.c.l.b16 %v1032
        %v1041 = vunpack.c.l.b16 %v1033
        %v1042 = vunpack.c.l.b16 %v1034
        %v1043 = vunpack.c.l.b16 %v1035
        %v1044 = vpack.c.b16 %v1041, %v1040
        %v1045 = vpack.c.b16 %v1043, %v1042
        %v1049 = vsel %vm1002, %v1031, 0
        %1051 = vmatprep.subr.bf16.mxu0 0
        %1052 = vmatpush1.bf16.msra.mxu0 0
        %1053 = vmatprep.subr.bf16.mxu0 0
        %1054 = vmatpush1.bf16.msra.mxu0 0
        %1055 = vmatprep.subr.bf16.mxu0 0
        %1056 = vmatpush1.bf16.msra.mxu0 0
        %1057 = vmatprep.subr.bf16.mxu0 0
        %1058 = vmatpush1.bf16.msra.mxu0 0
        %1059 = vmatprep.subr.bf16.mxu0 0
        %1060 = vmatpush1.bf16.msra.mxu0 0
        %1061 = vmatprep.subr.bf16.mxu0 0
        %1062 = vmatpush1.bf16.msra.mxu0 0
        %1063 = vmatprep.subr.bf16.mxu0 0
        %1064 = vmatpush1.bf16.msra.mxu0 %v1045
        %1065 = vmatprep.subr.bf16.mxu0 0
        %1066 = vmatpush1.bf16.msra.mxu0 %v1044
        %1067 = vmatprep.subr.bf16.mxu0 0
        %1068 = vmatpush2.bf16.msra.mxu0 0
        %1069 = vmatprep.subr.bf16.mxu0 0
        %1070 = vmatpush2.bf16.msra.mxu0 0
        %1071 = vmatprep.subr.bf16.mxu0 0
        %1072 = vmatpush2.bf16.msra.mxu0 0
        %1073 = vmatprep.subr.bf16.mxu0 0
        %1074 = vmatpush2.bf16.msra.mxu0 0
        %1075 = vmatprep.subr.bf16.mxu0 0
        %1076 = vmatpush2.bf16.msra.mxu0 0
        %1077 = vmatprep.subr.bf16.mxu0 0
        %1078 = vmatpush2.bf16.msra.mxu0 0
        %1079 = vmatprep.subr.bf16.mxu0 0
        %1080 = vmatpush2.bf16.msra.mxu0 0
        %1081 = vmatprep.subr.bf16.mxu0 0
        %1082 = vmatpush2.bf16.msra.mxu0 0
        %1083 = vmatprep.mubr.bf16.mxu0 0
        %1084 = vmatmul.mubr.bf16.gmra.mxu0 %v1049
        %v1085 = vpop.f32.mrf.mxu0
        %v1086 = vadd.f32 0.0, %v1085
        %v1087 = vpop.f32.mrf.mxu0
        %v1088 = vpop.f32.mrf.mxu0
        %v1089 = vpop.f32.mrf.mxu0
        %1090 = vdwg.mxu0
        %v1091 = vpack.c.bf16 %v1086, %v1086
        %1093 = vrot.lane.b32.xlu0 %v1091, 64
        %v1094 = vpop.permute.xlu0 %1093
        %v1096 = vunpack.c.l.s4 1983009808
        %v1097 = vunpack.c.0.s8 %v1096
        %v1098 = vlaneseq
        %v1099 = vshrl.u32 %v1098, 7
        %v1100 = vsub.s32 %v1097, %v1099
        %v1101 = vrot.slane %v1091, %v1100
        %v1102 = vcombine.high %v1101, 0
        %v1104 = vunpack.c.l.s4 1934713408
        %v1105 = vunpack.c.0.s8 %v1104
        %v1106 = vlaneseq
        %v1107 = vshrl.u32 %v1106, 7
        %v1108 = vsub.s32 %v1105, %v1107
        %v1109 = vrot.slane %v1101, %v1108
        %v1111 = vunpack.c.l.s4 1934713408
        %v1112 = vunpack.c.0.s8 %v1111
        %v1113 = vlaneseq
        %v1114 = vshrl.u32 %v1113, 7
        %v1115 = vsub.s32 %v1112, %v1114
        %v1116 = vrot.slane %v1102, %v1115
        %v1117 = vcombine.high %v1109, 0
        %v1118 = vcombine.high %v1116, 0
        %v1121 = vunpack.c.l.s4 1983009808
        %v1122 = vunpack.c.0.s8 %v1121
        %v1123 = vlaneseq
        %v1124 = vshrl.u32 %v1123, 7
        %v1125 = vsub.s32 %v1122, %v1124
        %v1126 = vrot.slane %v1094, %v1125
        %v1127 = vcombine.high %v1126, 0
        %v1129 = vunpack.c.l.s4 1934713408
        %v1130 = vunpack.c.0.s8 %v1129
        %v1131 = vlaneseq
        %v1132 = vshrl.u32 %v1131, 7
        %v1133 = vsub.s32 %v1130, %v1132
        %v1134 = vrot.slane %v1126, %v1133
        %v1136 = vunpack.c.l.s4 1934713408
        %v1137 = vunpack.c.0.s8 %v1136
        %v1138 = vlaneseq
        %v1139 = vshrl.u32 %v1138, 7
        %v1140 = vsub.s32 %v1137, %v1139
        %v1141 = vrot.slane %v1127, %v1140
        %v1142 = vcombine.high %v1134, 0
        %v1143 = vcombine.high %v1141, 0
        %v1146 = vpack.i.b16 %v1134, %v1109
        %v1148 = vshrl.u32 %v1109, 16
        %v1149 = vshrl.u32 %v1134, 16
        %v1150 = vpack.i.b16 %v1149, %v1148
        %v1154 = vpack.i.b16 %v1142, %v1117
        %v1156 = vshrl.u32 %v1117, 16
        %v1157 = vshrl.u32 %v1142, 16
        %v1158 = vpack.i.b16 %v1157, %v1156
        %v1162 = vpack.i.b16 %v1141, %v1116
        %v1164 = vshrl.u32 %v1116, 16
        %v1165 = vshrl.u32 %v1141, 16
        %v1166 = vpack.i.b16 %v1165, %v1164
        %v1170 = vpack.i.b16 %v1143, %v1118
        %v1172 = vshrl.u32 %v1118, 16
        %v1173 = vshrl.u32 %v1143, 16
        %v1174 = vpack.i.b16 %v1173, %v1172
        %v1176 = vcombine.low %v1146, %v1162
        %v1178 = vunpack.c.l.s4 1983009808
        %v1179 = vunpack.c.0.s8 %v1178
        %v1180 = vlaneseq
        %v1181 = vshrl.u32 %v1180, 7
        %v1182 = vsub.s32 %v1179, %v1181
        %v1183 = vrot.slane %v1176, %v1182
        %v1184 = vcombine.low %v1154, %v1170
        %v1186 = vunpack.c.l.s4 1983009808
        %v1187 = vunpack.c.0.s8 %v1186
        %v1188 = vlaneseq
        %v1189 = vshrl.u32 %v1188, 7
        %v1190 = vsub.s32 %v1187, %v1189
        %v1191 = vrot.slane %v1184, %v1190
        %v1192 = vcombine.low %v1183, %v1191
        %v1194 = vunpack.c.l.s4 1934713408
        %v1195 = vunpack.c.0.s8 %v1194
        %v1196 = vlaneseq
        %v1197 = vshrl.u32 %v1196, 7
        %v1198 = vsub.s32 %v1195, %v1197
        %v1199 = vrot.slane %v1192, %v1198
        %v1200 = vcombine.low %v1150, %v1166
        %v1202 = vunpack.c.l.s4 1983009808
        %v1203 = vunpack.c.0.s8 %v1202
        %v1204 = vlaneseq
        %v1205 = vshrl.u32 %v1204, 7
        %v1206 = vsub.s32 %v1203, %v1205
        %v1207 = vrot.slane %v1200, %v1206
        %v1208 = vcombine.low %v1158, %v1174
        %v1210 = vunpack.c.l.s4 1983009808
        %v1211 = vunpack.c.0.s8 %v1210
        %v1212 = vlaneseq
        %v1213 = vshrl.u32 %v1212, 7
        %v1214 = vsub.s32 %v1211, %v1213
        %v1215 = vrot.slane %v1208, %v1214
        %v1216 = vcombine.low %v1207, %v1215
        %v1218 = vunpack.c.l.s4 1934713408
        %v1219 = vunpack.c.0.s8 %v1218
        %v1220 = vlaneseq
        %v1221 = vshrl.u32 %v1220, 7
        %v1222 = vsub.s32 %v1219, %v1221
        %v1223 = vrot.slane %v1216, %v1222
        %v1226 = vpack.i.b16 %v1223, %v1199
        %v1227 = vshrl.u32 %v1199, 16
        %v1228 = vshrl.u32 %v1223, 16
        %v1229 = vpack.i.b16 %v1228, %v1227
        %v1230 = vld [vmem:[#allocation2] sm:$0xf]
        %v1231 = vld [vmem:[#allocation2 + $0x4] sm:$0xf]
        %v1232 = vld [vmem:[#allocation2 + $0x8] sm:$0xf]
        %v1233 = vld [vmem:[#allocation2 + $0xc] sm:$0xf]
        %v1234 = vld [vmem:[#allocation3] sm:$0xf]
        %v1235 = vld [vmem:[#allocation3 + $0x4] sm:$0xf]
        %v1236 = vld [vmem:[#allocation3 + $0x8] sm:$0xf]
        %v1237 = vld [vmem:[#allocation3 + $0xc] sm:$0xf]
        %v1240 = vunpack.c.l.b16 %v1230
        %v1241 = vunpack.c.l.b16 %v1231
        %v1242 = vpack.c.b16 %v1241, %v1240
        %vm1243 = vcmask 523264
        %v1245 = vsel %vm1243, %v1226, 0
        %v1248 = vsel %vm1243, %v1242, 0
        %1250 = vmatprep.subr.bf16.mxu0 0
        %1251 = vmatpush1.bf16.xpose.msra.mxu0 0
        %1252 = vmatprep.subr.bf16.mxu0 0
        %1253 = vmatpush1.bf16.xpose.msra.mxu0 0
        %1254 = vmatprep.subr.bf16.mxu0 0
        %1255 = vmatpush1.bf16.xpose.msra.mxu0 0
        %1256 = vmatprep.subr.bf16.mxu0 0
        %1257 = vmatpush1.bf16.xpose.msra.mxu0 0
        %1258 = vmatprep.subr.bf16.mxu0 0
        %1259 = vmatpush1.bf16.xpose.msra.mxu0 0
        %1260 = vmatprep.subr.bf16.mxu0 0
        %1261 = vmatpush1.bf16.xpose.msra.mxu0 0
        %1262 = vmatprep.subr.bf16.mxu0 0
        %1263 = vmatpush1.bf16.xpose.msra.mxu0 0
        %1264 = vmatprep.subr.bf16.mxu0 0
        %1265 = vmatpush1.bf16.xpose.msra.mxu0 %v1248
        %1266 = vmatprep.subr.bf16.mxu0 0
        %1267 = vmatpush2.bf16.xpose.msra.mxu0 0
        %1268 = vmatprep.subr.bf16.mxu0 0
        %1269 = vmatpush2.bf16.xpose.msra.mxu0 0
        %1270 = vmatprep.subr.bf16.mxu0 0
        %1271 = vmatpush2.bf16.xpose.msra.mxu0 0
        %1272 = vmatprep.subr.bf16.mxu0 0
        %1273 = vmatpush2.bf16.xpose.msra.mxu0 0
        %1274 = vmatprep.subr.bf16.mxu0 0
        %1275 = vmatpush2.bf16.xpose.msra.mxu0 0
        %1276 = vmatprep.subr.bf16.mxu0 0
        %1277 = vmatpush2.bf16.xpose.msra.mxu0 0
        %1278 = vmatprep.subr.bf16.mxu0 0
        %1279 = vmatpush2.bf16.xpose.msra.mxu0 0
        %1280 = vmatprep.subr.bf16.mxu0 0
        %1281 = vmatpush2.bf16.xpose.msra.mxu0 0
        %1282 = vmatprep.mubr.bf16.mxu0 0
        %1283 = vmatmul.mubr.bf16.gmra.mxu0 %v1245
        %v1284 = vpop.f32.mrf.mxu0
        %v1285 = vadd.f32 0.0, %v1284
        %v1286 = vpop.f32.mrf.mxu0
        %v1287 = vpop.f32.mrf.mxu0
        %v1288 = vpop.f32.mrf.mxu0
        %1289 = vdwg.mxu0
        %v1292 = vunpack.c.l.b16 %v1232
        %v1293 = vunpack.c.l.b16 %v1233
        %v1294 = vpack.c.b16 %v1293, %v1292
        %v1296 = vsel %vm1243, %v1229, 0
        %v1299 = vsel %vm1243, %v1294, 0
        %1301 = vmatprep.subr.bf16.mxu0 0
        %1302 = vmatpush1.bf16.xpose.msra.mxu0 0
        %1303 = vmatprep.subr.bf16.mxu0 0
        %1304 = vmatpush1.bf16.xpose.msra.mxu0 0
        %1305 = vmatprep.subr.bf16.mxu0 0
        %1306 = vmatpush1.bf16.xpose.msra.mxu0 0
        %1307 = vmatprep.subr.bf16.mxu0 0
        %1308 = vmatpush1.bf16.xpose.msra.mxu0 0
        %1309 = vmatprep.subr.bf16.mxu0 0
        %1310 = vmatpush1.bf16.xpose.msra.mxu0 0
        %1311 = vmatprep.subr.bf16.mxu0 0
        %1312 = vmatpush1.bf16.xpose.msra.mxu0 0
        %1313 = vmatprep.subr.bf16.mxu0 0
        %1314 = vmatpush1.bf16.xpose.msra.mxu0 0
        %1315 = vmatprep.subr.bf16.mxu0 0
        %1316 = vmatpush1.bf16.xpose.msra.mxu0 %v1299
        %1317 = vmatprep.subr.bf16.mxu0 0
        %1318 = vmatpush2.bf16.xpose.msra.mxu0 0
        %1319 = vmatprep.subr.bf16.mxu0 0
        %1320 = vmatpush2.bf16.xpose.msra.mxu0 0
        %1321 = vmatprep.subr.bf16.mxu0 0
        %1322 = vmatpush2.bf16.xpose.msra.mxu0 0
        %1323 = vmatprep.subr.bf16.mxu0 0
        %1324 = vmatpush2.bf16.xpose.msra.mxu0 0
        %1325 = vmatprep.subr.bf16.mxu0 0
        %1326 = vmatpush2.bf16.xpose.msra.mxu0 0
        %1327 = vmatprep.subr.bf16.mxu0 0
        %1328 = vmatpush2.bf16.xpose.msra.mxu0 0
        %1329 = vmatprep.subr.bf16.mxu0 0
        %1330 = vmatpush2.bf16.xpose.msra.mxu0 0
        %1331 = vmatprep.subr.bf16.mxu0 0
        %1332 = vmatpush2.bf16.xpose.msra.mxu0 0
        %1333 = vmatprep.mubr.bf16.mxu0 0
        %1334 = vmatmul.mubr.bf16.gmra.mxu0 %v1296
        %v1335 = vpop.f32.mrf.mxu0
        %v1336 = vadd.f32 0.0, %v1335
        %v1337 = vpop.f32.mrf.mxu0
        %v1338 = vpop.f32.mrf.mxu0
        %v1339 = vpop.f32.mrf.mxu0
        %1340 = vdwg.mxu0
        %vm1341 = vcmask 130048
        %v1342 = vsel %vm1341, %v1285, -inf
        %1343 = vmax.xlane.f32.xlu0 %v1342
        %v1344 = vpop.xlane.xlu0 %1343
        %v1345 = vsel %vm1341, %v1336, -inf
        %1346 = vmax.xlane.f32.xlu0 %v1345
        %v1347 = vpop.xlane.xlu0 %1346
        %v1348 = vsub.f32 %v1285, %v1344
        %v1349 = vsub.f32 %v1336, %v1347
        %v1350 = vmul.f32 %v1348, 1.442695
        %v1351 = vpow.pop %v1350
        %v1352 = vmul.f32 %v1349, 1.442695
        %v1353 = vpow.pop %v1352
        %v1354 = vsel %vm1341, %v1351, 0.0
        %1355 = vadd.xlane.f32.xlu0 %v1354
        %v1356 = vpop.xlane.xlu0 %1355
        %v1357 = vsel %vm1341, %v1353, 0.0
        %1358 = vadd.xlane.f32.xlu0 %v1357
        %v1359 = vpop.xlane.xlu0 %1358
        %v1360 = vpack.c.bf16 %v1351, %v1351
        %v1361 = vpack.c.bf16 %v1353, %v1353
        %v1362 = vrcp.pop %v1356
        %v1363 = vrcp.pop %v1359
        %v1366 = vunpack.c.l.b16 %v1234
        %v1367 = vunpack.c.l.b16 %v1235
        %v1368 = vpack.c.b16 %v1367, %v1366
        %v1371 = vsel %vm1341, %v1360, 0
        %1373 = vmatprep.subr.bf16.mxu0 0
        %1374 = vmatpush1.bf16.msra.mxu0 0
        %1375 = vmatprep.subr.bf16.mxu0 0
        %1376 = vmatpush1.bf16.msra.mxu0 0
        %1377 = vmatprep.subr.bf16.mxu0 0
        %1378 = vmatpush1.bf16.msra.mxu0 0
        %1379 = vmatprep.subr.bf16.mxu0 0
        %1380 = vmatpush1.bf16.msra.mxu0 0
        %1381 = vmatprep.subr.bf16.mxu0 0
        %1382 = vmatpush1.bf16.msra.mxu0 0
        %1383 = vmatprep.subr.bf16.mxu0 0
        %1384 = vmatpush1.bf16.msra.mxu0 0
        %1385 = vmatprep.subr.bf16.mxu0 0
        %1386 = vmatpush1.bf16.msra.mxu0 0
        %1387 = vmatprep.subr.bf16.mxu0 0
        %1388 = vmatpush1.bf16.msra.mxu0 %v1368
        %1389 = vmatprep.subr.bf16.mxu0 0
        %1390 = vmatpush2.bf16.msra.mxu0 0
        %1391 = vmatprep.subr.bf16.mxu0 0
        %1392 = vmatpush2.bf16.msra.mxu0 0
        %1393 = vmatprep.subr.bf16.mxu0 0
        %1394 = vmatpush2.bf16.msra.mxu0 0
        %1395 = vmatprep.subr.bf16.mxu0 0
        %1396 = vmatpush2.bf16.msra.mxu0 0
        %1397 = vmatprep.subr.bf16.mxu0 0
        %1398 = vmatpush2.bf16.msra.mxu0 0
        %1399 = vmatprep.subr.bf16.mxu0 0
        %1400 = vmatpush2.bf16.msra.mxu0 0
        %1401 = vmatprep.subr.bf16.mxu0 0
        %1402 = vmatpush2.bf16.msra.mxu0 0
        %1403 = vmatprep.subr.bf16.mxu0 0
        %1404 = vmatpush2.bf16.msra.mxu0 0
        %1405 = vmatprep.mubr.bf16.mxu0 0
        %1406 = vmatmul.mubr.bf16.gmra.mxu0 %v1371
        %v1407 = vpop.f32.mrf.mxu0
        %v1408 = vadd.f32 0.0, %v1407
        %v1409 = vpop.f32.mrf.mxu0
        %v1410 = vpop.f32.mrf.mxu0
        %v1411 = vpop.f32.mrf.mxu0
        %1412 = vdwg.mxu0
        %v1415 = vunpack.c.l.b16 %v1236
        %v1416 = vunpack.c.l.b16 %v1237
        %v1417 = vpack.c.b16 %v1416, %v1415
        %v1420 = vsel %vm1341, %v1361, 0
        %1422 = vmatprep.subr.bf16.mxu0 0
        %1423 = vmatpush1.bf16.msra.mxu0 0
        %1424 = vmatprep.subr.bf16.mxu0 0
        %1425 = vmatpush1.bf16.msra.mxu0 0
        %1426 = vmatprep.subr.bf16.mxu0 0
        %1427 = vmatpush1.bf16.msra.mxu0 0
        %1428 = vmatprep.subr.bf16.mxu0 0
        %1429 = vmatpush1.bf16.msra.mxu0 0
        %1430 = vmatprep.subr.bf16.mxu0 0
        %1431 = vmatpush1.bf16.msra.mxu0 0
        %1432 = vmatprep.subr.bf16.mxu0 0
        %1433 = vmatpush1.bf16.msra.mxu0 0
        %1434 = vmatprep.subr.bf16.mxu0 0
        %1435 = vmatpush1.bf16.msra.mxu0 0
        %1436 = vmatprep.subr.bf16.mxu0 0
        %1437 = vmatpush1.bf16.msra.mxu0 %v1417
        %1438 = vmatprep.subr.bf16.mxu0 0
        %1439 = vmatpush2.bf16.msra.mxu0 0
        %1440 = vmatprep.subr.bf16.mxu0 0
        %1441 = vmatpush2.bf16.msra.mxu0 0
        %1442 = vmatprep.subr.bf16.mxu0 0
        %1443 = vmatpush2.bf16.msra.mxu0 0
        %1444 = vmatprep.subr.bf16.mxu0 0
        %1445 = vmatpush2.bf16.msra.mxu0 0
        %1446 = vmatprep.subr.bf16.mxu0 0
        %1447 = vmatpush2.bf16.msra.mxu0 0
        %1448 = vmatprep.subr.bf16.mxu0 0
        %1449 = vmatpush2.bf16.msra.mxu0 0
        %1450 = vmatprep.subr.bf16.mxu0 0
        %1451 = vmatpush2.bf16.msra.mxu0 0
        %1452 = vmatprep.subr.bf16.mxu0 0
        %1453 = vmatpush2.bf16.msra.mxu0 0
        %1454 = vmatprep.mubr.bf16.mxu0 0
        %1455 = vmatmul.mubr.bf16.gmra.mxu0 %v1420
        %v1456 = vpop.f32.mrf.mxu0
        %v1457 = vadd.f32 0.0, %v1456
        %v1458 = vpop.f32.mrf.mxu0
        %v1459 = vpop.f32.mrf.mxu0
        %v1460 = vpop.f32.mrf.mxu0
        %1461 = vdwg.mxu0
        %v1462 = vmul.f32 %v1408, %v1362
        %v1463 = vmul.f32 %v1457, %v1363
        %v1464 = vcombine.high %v1462, 0.0
        %v1466 = vunpack.c.l.s4 1983009808
        %v1467 = vunpack.c.0.s8 %v1466
        %v1468 = vlaneseq
        %v1469 = vshrl.u32 %v1468, 7
        %v1470 = vsub.s32 %v1467, %v1469
        %v1471 = vrot.slane %v1462, %v1470
        %v1473 = vunpack.c.l.s4 1983009808
        %v1474 = vunpack.c.0.s8 %v1473
        %v1475 = vlaneseq
        %v1476 = vshrl.u32 %v1475, 7
        %v1477 = vsub.s32 %v1474, %v1476
        %v1478 = vrot.slane %v1464, %v1477
        %v1479 = vcombine.high %v1463, 0.0
        %v1481 = vunpack.c.l.s4 1983009808
        %v1482 = vunpack.c.0.s8 %v1481
        %v1483 = vlaneseq
        %v1484 = vshrl.u32 %v1483, 7
        %v1485 = vsub.s32 %v1482, %v1484
        %v1486 = vrot.slane %v1463, %v1485
        %v1488 = vunpack.c.l.s4 1983009808
        %v1489 = vunpack.c.0.s8 %v1488
        %v1490 = vlaneseq
        %v1491 = vshrl.u32 %v1490, 7
        %v1492 = vsub.s32 %v1489, %v1491
        %v1493 = vrot.slane %v1479, %v1492
        %v1494 = vcombine.low %v1471, %v1486
        %v1495 = vcombine.high %v1471, %v1486
        %v1497 = vunpack.c.l.s4 1934713408
        %v1498 = vunpack.c.0.s8 %v1497
        %v1499 = vlaneseq
        %v1500 = vshrl.u32 %v1499, 7
        %v1501 = vsub.s32 %v1498, %v1500
        %v1502 = vrot.slane %v1494, %v1501
        %v1504 = vunpack.c.l.s4 1934713408
        %v1505 = vunpack.c.0.s8 %v1504
        %v1506 = vlaneseq
        %v1507 = vshrl.u32 %v1506, 7
        %v1508 = vsub.s32 %v1505, %v1507
        %v1509 = vrot.slane %v1495, %v1508
        %v1510 = vcombine.low %v1478, %v1493
        %v1511 = vcombine.high %v1478, %v1493
        %v1513 = vunpack.c.l.s4 1934713408
        %v1514 = vunpack.c.0.s8 %v1513
        %v1515 = vlaneseq
        %v1516 = vshrl.u32 %v1515, 7
        %v1517 = vsub.s32 %v1514, %v1516
        %v1518 = vrot.slane %v1510, %v1517
        %v1520 = vunpack.c.l.s4 1934713408
        %v1521 = vunpack.c.0.s8 %v1520
        %v1522 = vlaneseq
        %v1523 = vshrl.u32 %v1522, 7
        %v1524 = vsub.s32 %v1521, %v1523
        %v1525 = vrot.slane %v1511, %v1524
        %v1526 = vcombine.high %v1502, 0.0
        %v1527 = vcombine.high %v1509, 0.0
        %v1528 = vcombine.high %v1518, 0.0
        %v1529 = vcombine.high %v1525, 0.0
        %v1530 = vcombine.low %v1502, %v1509
        %v1532 = vunpack.c.l.s4 1983009808
        %v1533 = vunpack.c.0.s8 %v1532
        %v1534 = vlaneseq
        %v1535 = vshrl.u32 %v1534, 7
        %v1536 = vsub.s32 %v1533, %v1535
        %v1537 = vrot.slane %v1530, %v1536
        %v1538 = vcombine.low %v1526, %v1527
        %v1540 = vunpack.c.l.s4 1983009808
        %v1541 = vunpack.c.0.s8 %v1540
        %v1542 = vlaneseq
        %v1543 = vshrl.u32 %v1542, 7
        %v1544 = vsub.s32 %v1541, %v1543
        %v1545 = vrot.slane %v1538, %v1544
        %v1546 = vcombine.low %v1518, %v1525
        %v1548 = vunpack.c.l.s4 1983009808
        %v1549 = vunpack.c.0.s8 %v1548
        %v1550 = vlaneseq
        %v1551 = vshrl.u32 %v1550, 7
        %v1552 = vsub.s32 %v1549, %v1551
        %v1553 = vrot.slane %v1546, %v1552
        %v1554 = vcombine.low %v1528, %v1529
        %v1556 = vunpack.c.l.s4 1983009808
        %v1557 = vunpack.c.0.s8 %v1556
        %v1558 = vlaneseq
        %v1559 = vshrl.u32 %v1558, 7
        %v1560 = vsub.s32 %v1557, %v1559
        %v1561 = vrot.slane %v1554, %v1560
        %v1562 = vcombine.low %v1537, %v1545
        %v1564 = vunpack.c.l.s4 1934713408
        %v1565 = vunpack.c.0.s8 %v1564
        %v1566 = vlaneseq
        %v1567 = vshrl.u32 %v1566, 7
        %v1568 = vsub.s32 %v1565, %v1567
        %v1569 = vrot.slane %v1562, %v1568
        %v1570 = vcombine.low %v1553, %v1561
        %v1572 = vunpack.c.l.s4 1934713408
        %v1573 = vunpack.c.0.s8 %v1572
        %v1574 = vlaneseq
        %v1575 = vshrl.u32 %v1574, 7
        %v1576 = vsub.s32 %v1573, %v1575
        %v1577 = vrot.slane %v1570, %v1576
        %v1578 = vcombine.low %v1569, %v1577
        %v1579 = vcombine.high %v1569, %v1577
        %1581 = vrot.lane.b32.xlu0 %v1579, 64
        %v1582 = vpop.permute.xlu0 %1581
        %v1584 = vsel %vm1243, %v1578, %v1582
        %1585 = vst [vmem:[%s407] sm:$0xff] %v1584
        %s1586 = sand.u32 %s231, 1
        %s1587 = scalar_lea.sflag [#allocation6], %s1586
        %s1588 = sand.u32 %s231, 1
        %s1589 = smul.addr %s1588, 8
        %s1590 = scalar_lea.vmem [#allocation12], %s1589
        // Predicated region
        $region73: #{tpu_custom_call.1} parent=51 // pred_check
          %p1591 = pneg %p241
        $region74: #{tpu_custom_call.1} parent=51 // pred_check_branch
          %1593 = sbr.rel (%p1591) target = $region76
        $region75: #{tpu_custom_call.1} parent=51 // pred_region
          %s1595 = ssub.s32 128, 128
          %1596 = vsyncadd %s1587, %s1595
          %s1597 = smul.addr %s33, 2
          %s1598 = sadd.s32 %s34, %s1597
          %s1599 = smul.addr %s1598, 128
          %s1600 = scalar_lea.hbm %s8, %s1599
          %s1602 = sshll.u32 %s1590, 4
          %s1603 = int_to_ptr.vmem [resolvable:$true] %s1602
          %1605 = dma.vmem_to_hbm [thread:$0]  %s1603, 128, %s1600, %s1587
        $region76: #{tpu_custom_call.1} parent=51 // pred_fallthru
          _
      $region52: #{tpu_custom_call.1} parent=5 // pred_fallthru
        _
      %p1606 = scmp.le.s32.totalorder 2, %s24
      // Predicated region
      $region77: #{tpu_custom_call.1} parent=5 // pred_check
        %p1607 = pneg %p1606
      $region78: #{tpu_custom_call.1} parent=5 // pred_check_branch
        %1609 = sbr.rel (%p1607) target = $region80
      $region79: #{tpu_custom_call.1} parent=5 // pred_region
        %s1610 = ssub.s32 %s24, 2
        // Predicated region
        $region81: #{tpu_custom_call.1} parent=79 // pred_check
          %p1611 = pneg %p247
        $region82: #{tpu_custom_call.1} parent=79 // pred_check_branch
          %1613 = sbr.rel (%p1611) target = $region84
        $region83: #{tpu_custom_call.1} parent=79 // pred_region
          %s1614 = sand.u32 %s232, 1
          %s1615 = scalar_lea.sflag [#allocation6], %s1614
          %s1616 = sand.u32 %s232, 1
          %s1617 = smul.addr %s1616, 8
          %s1618 = scalar_lea.vmem [#allocation12], %s1617
          %1619 = dma.done %s1615, 128
        $region84: #{tpu_custom_call.1} parent=79 // pred_fallthru
          _
      $region80: #{tpu_custom_call.1} parent=5 // pred_fallthru
        _
    $region6: #{tpu_custom_call.1} parent=1 // loop_footer
      %s28 = sadd.s32 1, %s24
    $region7: #{tpu_custom_call.1} parent=1 // loop_footer_branch
      %23 = sbr.rel target = $region3
    $region8: #{tpu_custom_call.1} parent=1 // loop_exit
      _
    %1620 = vsyncpa [#allocation5], 1
    %s1621 = scalar_lea.sflag [#allocation5], 1
    %1622 = vsyncpa %s1621, 1
    %1623 = vsyncpa [#allocation8], 1
    %s1624 = scalar_lea.sflag [#allocation8], 1
    %1625 = vsyncpa %s1624, 1
    %1626 = vsyncpa [#allocation11], 1
    %1627 = vsyncpa [#allocation6], 1
    %s1628 = scalar_lea.sflag [#allocation6], 1
    %1629 = vsyncpa %s1628, 1

</llo_original>
